<compile_context>
chip_gen: v5e
topology: v5e:2x2
jax: 0.10.0
libtpu: 0.0.40
codegen_flags: <defaults>
</compile_context>

<pallas_src>
import jax
import jax.numpy as jnp
from jax.experimental import pallas as pl
from jax.experimental.pallas import tpu as pltpu


# Minimum second-to-last (sublane) tile multiple per element size.
_SUBLANE = {4: 8, 2: 16, 1: 32}


def _make_kernel(tm, resident_gate):
    def kernel(g_ref, x_ref, o_ref):
        if resident_gate:
            # g_ref holds the full (nc, 1) gate; take this block's tm rows.
            start = pl.multiple_of(pl.program_id(0) * tm, tm)
            g = g_ref[pl.ds(start, tm), :]
        else:
            g = g_ref[...]                                   # (tm, 1) block
        g = jax.nn.sigmoid(g.astype(jnp.float32))            # tiny, EUP
        # f32 features: no casts at all.  Sub-32-bit features: promoted to
        # f32 by the multiply, cast back at the store.
        o_ref[...] = (g * x_ref[...]).astype(o_ref.dtype)
    return kernel


def _select_row_tile(nc, hw, x_itemsize, g_itemsize, vmem_budget_bytes):
    """Pick (tm, resident_gate) with padding-aware VMEM accounting."""
    sublane = _SUBLANE.get(x_itemsize, 8)
    hw_pad = -(-hw // 128) * 128                  # lane padding of feature rows
    row_bytes = hw_pad * x_itemsize               # padded VMEM bytes per row
    gate_bytes = 2 * nc * 128 * g_itemsize        # resident (nc,1), lane-padded

    def fits(tm):
        # Feature in + out streams, each double-buffered, plus resident gate.
        return 2 * 2 * tm * row_bytes + gate_bytes <= vmem_budget_bytes

    candidates = [tm for tm in range(sublane, nc, sublane)
                  if nc % tm == 0 and fits(tm)]
    if fits(nc):
        candidates.append(nc)                     # full-array block always legal

    if candidates:
        # Preferred: exactly two full blocks (grid = 2).
        for tm in candidates:
            if nc // tm == 2:
                return tm, True
        # Otherwise: fewest steps, preferring an even grid (v7x balance).
        even = [tm for tm in candidates if (nc // tm) % 2 == 0]
        return max(even if even else candidates), True

    # Nothing that divides nc fits VMEM: fall back to a non-dividing row tile
    # (Pallas masks the partial last block; gate is re-tiled per block).
    tm = max(sublane, (vmem_budget_bytes // (2 * 3 * row_bytes)) // sublane * sublane)
    return min(tm, nc), False


def sigmoid_mul(gate_nchw, x_nchw, *, vmem_budget_bytes=12 * 1024 * 1024,
                donate_features=False):
    """out = sigmoid(gate_nchw) * x_nchw.

    gate_nchw: (N, C, 1, 1); x_nchw: (N, C, H, W).  Returns (N, C, H, W).
    """
    n, c, h, w = x_nchw.shape
    assert gate_nchw.shape == (n, c, 1, 1), gate_nchw.shape

    nc, hw = n * c, h * w
    x2d = x_nchw.reshape(nc, hw)                  # contiguous -> free reshape
    g2d = gate_nchw.reshape(nc, 1)

    x_itemsize = jnp.dtype(x_nchw.dtype).itemsize
    g_itemsize = jnp.dtype(gate_nchw.dtype).itemsize
    tm, resident_gate = _select_row_tile(nc, hw, x_itemsize, g_itemsize,
                                         vmem_budget_bytes)
    grid = (pl.cdiv(nc, tm),)

    if resident_gate:
        # Whole gate loaded once, resident across every grid step.
        gate_spec = pl.BlockSpec((nc, 1), lambda i: (0, 0))
    else:
        gate_spec = pl.BlockSpec((tm, 1), lambda i: (i, 0))

    out2d = pl.pallas_call(
        _make_kernel(tm, resident_gate),
        out_shape=jax.ShapeDtypeStruct((nc, hw), x_nchw.dtype),
        grid_spec=pltpu.PrefetchScalarGridSpec(
            num_scalar_prefetch=0,
            grid=grid,
            in_specs=[
                gate_spec,                                   # gate (resident)
                pl.BlockSpec((tm, hw), lambda i: (i, 0)),    # features
            ],
            out_specs=pl.BlockSpec((tm, hw), lambda i: (i, 0)),
        ),
        compiler_params=pltpu.CompilerParams(
            # Row blocks are independent -> shard across TensorCores on v7x;
            # a no-op on single-TC v5e/v6e.
            dimension_semantics=("parallel",),
        ),
        # Optional in-place update; only worth it when the caller can donate
        # the feature buffer (a live input would force XLA to insert a copy).
        input_output_aliases=({1: 0} if donate_features else {}),
    )(g2d, x2d)

    return out2d.reshape(n, c, h, w)


if __name__ == "__main__":
    # Exact module shapes (already small: ~357 KB of feature data).
    N, C, H, W = 1, 1824, 7, 7
    key = jax.random.PRNGKey(0)
    k1, k2 = jax.random.split(key)
    x436 = jax.random.normal(k1, (N, C, H, W), dtype=jnp.float32)
    x440 = jax.random.normal(k2, (N, C, 1, 1), dtype=jnp.float32)

    out = sigmoid_mul(x440, x436)
    out = jax.block_until_ready(out)

    # Correctness check against plain-JAX reference.
    ref = jax.nn.sigmoid(x440) * x436
    assert out.shape == (N, C, H, W)
    assert jnp.allclose(out, ref, atol=1e-6, rtol=1e-6)

    print("KERNEL_OK")
</pallas_src>

<mosaic_0001>
module attributes {stable_mosaic.version = 11 : i64} {
  func.func @kernel(%arg0: i32, %arg1: memref<1824x1xf32, #tpu.memory_space<vmem>>, %arg2: memref<912x49xf32, #tpu.memory_space<vmem>>, %arg3: memref<912x49xf32, #tpu.memory_space<vmem>>) attributes {dimension_semantics = [#tpu.dimension_semantics<parallel>], iteration_bounds = array<i64: 2>, scalar_prefetch = 0 : i64, scratch_operands = 0 : i64, tpu.core_type = #tpu.core_type<tc>, window_params = [{pipeline_mode = #tpu.pipeline_mode<synchronous>, transform_indices = @transform_0, window_bounds = array<i64: 1824, 1>}, {transform_indices = @transform_1, window_bounds = array<i64: 912, 49>}, {transform_indices = @transform_2, window_bounds = array<i64: 912, 49>}]} {
    %c912_i32 = arith.constant 912 : i32
    %0 = arith.muli %arg0, %c912_i32 : i32
    %1 = tpu.assume_multiple %0, 912 : i32
    %2 = arith.index_cast %1 : i32 to index
    %c0 = arith.constant 0 : index
    %3 = vector.load %arg1[%2, %c0] : memref<1824x1xf32, #tpu.memory_space<vmem>>, vector<912x1xf32>
    %4 = arith.negf %3 : vector<912x1xf32>
    %5 = math.exp %4 : vector<912x1xf32>
    %cst = arith.constant 1.000000e+00 : f32
    %6 = vector.broadcast %cst : f32 to vector<912x1xf32>
    %7 = arith.addf %6, %5 : vector<912x1xf32>
    %8 = arith.divf %6, %7 : vector<912x1xf32>
    %c0_0 = arith.constant 0 : index
    %c0_1 = arith.constant 0 : index
    %9 = vector.load %arg2[%c0_0, %c0_1] : memref<912x49xf32, #tpu.memory_space<vmem>>, vector<912x49xf32>
    %10 = vector.broadcast %8 : vector<912x1xf32> to vector<912x49xf32>
    %11 = arith.mulf %10, %9 : vector<912x49xf32>
    %c0_2 = arith.constant 0 : index
    %c0_3 = arith.constant 0 : index
    %12 = vector.load %arg3[%c0_2, %c0_3] : memref<912x49xf32, #tpu.memory_space<vmem>>, vector<912x49xf32>
    tpu.vector_store %arg3[%c0_2, %c0_3], %11 {strides = array<i32>} : memref<912x49xf32, #tpu.memory_space<vmem>>, vector<912x49xf32>,
    return
  }
  func.func @transform_0(%arg0: i32) -> (i32, i32) {
    %c0_i32 = arith.constant 0 : i32
    %c0_i32_0 = arith.constant 0 : i32
    %c0_i32_1 = arith.constant 0 : i32
    return %c0_i32, %c0_i32_0 : i32, i32
  }
  func.func @transform_1(%arg0: i32) -> (i32, i32) {
    %c0_i32 = arith.constant 0 : i32
    %c0_i32_0 = arith.constant 0 : i32
    return %arg0, %c0_i32 : i32, i32
  }
  func.func @transform_2(%arg0: i32) -> (i32, i32) {
    %c0_i32 = arith.constant 0 : i32
    %c0_i32_0 = arith.constant 0 : i32
    return %arg0, %c0_i32 : i32, i32
  }
}

</mosaic_0001>

<llo_original>
// kernel: tpu_custom_call.1
$region0: #{tpu_custom_call.1}
  #allocation0 [shape = 'u32[]', space=smem, size = 0x4, offset = 0x4, fixed_abs, tag = 'smem constant byte address 0x4 - core index']
  #allocation1 [shape = 'u32[72,128]{1,0:T(1,128)}', space=vmem, size = 0x9000, scoped, tag = 'internal scratch']
  %s0 = inlined_call_operand.vmem [shape: f32[1824,1], index: 0, kind: input, shape index: {}]
  %s1 = inlined_call_operand.vmem [shape: f32[1824,49], index: 1, kind: input, shape index: {}]
  %s2 = inlined_call_operand.vmem [shape: f32[1824,49], index: 2, kind: output, shape index: {}]
  %s3 = sld [smem:[#allocation0]]
  $region41: #{tpu_custom_call.1} parent=0
    _
  %s5 = ssub.s32 1, %s3
  %s6 = scalar_select 0, %s5, %s3
  loop: start=0, step=1, limit=4
  $region2: #{tpu_custom_call.1} parent=0 // loop_pre_header
    _
  $region3: #{tpu_custom_call.1} parent=0 // loop_header
    %s8 = sphi 0, %s12
    %p9 = scmp.ge.s32.totalorder %s8, 4
    %s16 = sphi 0, %s16
    %s18 = sphi 0, %s16
    %s19 = sphi 0, %s18
    %s33 = sphi 0, %s19
    %s39 = sphi 0, %s41
    %s42 = sphi 0, %s39
    %s43 = sphi 0, %s42
    %s59 = sphi 0, %s43
    %s65 = sphi 0, %s67
    %s68 = sphi 0, %s65
    %s69 = sphi 0, %s68
    %s85 = sphi 0, %s69
  $region4: #{tpu_custom_call.1} parent=0 // loop_header_branch
    %11 = sbr.rel (%p9) target = $region8
  $region5: #{tpu_custom_call.1} parent=0 // loop_body
    %s13 = ssub.s32 %s8, 1
    %s14 = ssub.s32 %s8, 2
    %s15 = sadd.s32 %s8, 1
    %s17 = sadd.s32 %s16, 1
    %p20 = scmp.eq.s32.totalorder %s8, 1
    %p21 = scmp.ne.s32.totalorder %s16, %s18
    %p22 = scmp.eq.s32.totalorder %s8, 0
    %p23 = por %p21, %p22
    %p24 = scmp.ne.s32.totalorder %s16, %s18
    %p25 = scmp.eq.s32.totalorder %s13, 1
    %p26 = por %p24, %p25
    %p27 = scmp.ne.s32.totalorder %s18, %s19
    %p28 = scmp.eq.s32.totalorder %s13, 0
    %p29 = por %p27, %p28
    %p30 = scmp.ne.s32.totalorder %s18, %s19
    %p31 = scmp.eq.s32.totalorder %s14, 1
    %p32 = por %p30, %p31
    %p34 = scmp.ne.s32.totalorder %s19, %s33
    %p35 = scmp.eq.s32.totalorder %s14, 0
    %p36 = por %p34, %p35
    %s37 = ssub.s32 %s8, %s15
    %p38 = scmp.eq.s32.totalorder %s37, 0
    %s40 = sadd.s32 %s39, 1
    %s41 = scalar_select %p38, %s39, %s40
    %p44 = pneg %p38
    %p45 = scmp.eq.s32.totalorder %s8, 1
    %p46 = por %p44, %p45
    %p47 = scmp.ne.s32.totalorder %s39, %s42
    %p48 = scmp.eq.s32.totalorder %s8, 0
    %p49 = por %p47, %p48
    %p50 = scmp.ne.s32.totalorder %s39, %s42
    %p51 = scmp.eq.s32.totalorder %s13, 1
    %p52 = por %p50, %p51
    %p53 = scmp.ne.s32.totalorder %s42, %s43
    %p54 = scmp.eq.s32.totalorder %s13, 0
    %p55 = por %p53, %p54
    %p56 = scmp.ne.s32.totalorder %s42, %s43
    %p57 = scmp.eq.s32.totalorder %s14, 1
    %p58 = por %p56, %p57
    %p60 = scmp.ne.s32.totalorder %s43, %s59
    %p61 = scmp.eq.s32.totalorder %s14, 0
    %p62 = por %p60, %p61
    %s63 = ssub.s32 %s8, %s15
    %p64 = scmp.eq.s32.totalorder %s63, 0
    %s66 = sadd.s32 %s65, 1
    %s67 = scalar_select %p64, %s65, %s66
    %p70 = pneg %p64
    %p71 = scmp.eq.s32.totalorder %s8, 1
    %p72 = por %p70, %p71
    %p73 = scmp.ne.s32.totalorder %s65, %s68
    %p74 = scmp.eq.s32.totalorder %s8, 0
    %p75 = por %p73, %p74
    %p76 = scmp.ne.s32.totalorder %s65, %s68
    %p77 = scmp.eq.s32.totalorder %s13, 1
    %p78 = por %p76, %p77
    %p79 = scmp.ne.s32.totalorder %s68, %s69
    %p80 = scmp.eq.s32.totalorder %s13, 0
    %p81 = por %p79, %p80
    %p82 = scmp.ne.s32.totalorder %s68, %s69
    %p83 = scmp.eq.s32.totalorder %s14, 1
    %p84 = por %p82, %p83
    %p86 = scmp.ne.s32.totalorder %s69, %s85
    %p87 = scmp.eq.s32.totalorder %s14, 0
    %p88 = por %p86, %p87
    %p89 = scmp.le.s32.totalorder 1, %s8
    %p90 = scmp.lt.s32.totalorder %s8, 3
    %p91 = pnand %p89, %p90
    %p92 = pneg %p91
    // Predicated region
    $region9: #{tpu_custom_call.1} parent=5 // pred_check
      _
    $region10: #{tpu_custom_call.1} parent=5 // pred_check_branch
      %94 = sbr.rel (%p91) target = $region12
    $region11: #{tpu_custom_call.1} parent=5 // pred_region
      %s95 = ssub.s32 %s8, 1
      // Predicated region
      $region13: #{tpu_custom_call.1} parent=11 // pred_check
        %p96 = pneg %p29
      $region14: #{tpu_custom_call.1} parent=11 // pred_check_branch
        %98 = sbr.rel (%p96) target = $region16
      $region15: #{tpu_custom_call.1} parent=11 // pred_region
        _
      $region16: #{tpu_custom_call.1} parent=11 // pred_fallthru
        _
    $region12: #{tpu_custom_call.1} parent=5 // pred_fallthru
      _
    %p99 = scmp.lt.s32.totalorder %s8, 2
    // Predicated region
    $region17: #{tpu_custom_call.1} parent=5 // pred_check
      %p100 = pneg %p99
    $region18: #{tpu_custom_call.1} parent=5 // pred_check_branch
      %102 = sbr.rel (%p100) target = $region20
    $region19: #{tpu_custom_call.1} parent=5 // pred_region
      // Predicated region
      $region21: #{tpu_custom_call.1} parent=19 // pred_check
        %p103 = pneg %p49
      $region22: #{tpu_custom_call.1} parent=19 // pred_check_branch
        %105 = sbr.rel (%p103) target = $region24
      $region23: #{tpu_custom_call.1} parent=19 // pred_region
        %s106 = smul.u32 114, %s8
        %p107 = scmp.lt.s32.totalorder %s106, 227
        %s108 = scalar_select %p107, %s106, 227
        %s109 = smul.addr %s108, 8
        %s110 = scalar_lea.vmem %s1, %s109
        %s111 = smul.u32 114, %s8
      $region24: #{tpu_custom_call.1} parent=19 // pred_fallthru
        _
    $region20: #{tpu_custom_call.1} parent=5 // pred_fallthru
      _
    %p112 = scmp.le.s32.totalorder 1, %s8
    %p113 = scmp.lt.s32.totalorder %s8, 3
    %p114 = pnand %p112, %p113
    %p115 = pneg %p114
    // Predicated region
    $region25: #{tpu_custom_call.1} parent=5 // pred_check
      _
    $region26: #{tpu_custom_call.1} parent=5 // pred_check_branch
      %117 = sbr.rel (%p114) target = $region28
    $region27: #{tpu_custom_call.1} parent=5 // pred_region
      %s118 = ssub.s32 %s8, 1
      %p119 = pneg %p29
      %p120 = pneg %p26
      %s121 = smul.u32 114, %s13
      %p122 = scmp.lt.s32.totalorder %s121, 227
      %s123 = scalar_select %p122, %s121, 227
      %s124 = smul.addr %s123, 8
      %s125 = scalar_lea.vmem %s1, %s124
      %p126 = pneg %p55
      %p127 = pneg %p52
      %p128 = pneg %p81
      %p129 = pneg %p78
      %s130 = smul.u32 114, %s13
      %p131 = scmp.lt.s32.totalorder %s130, 227
      %s132 = scalar_select %p131, %s130, 227
      %s133 = smul.addr %s132, 8
      %s134 = scalar_lea.vmem %s2, %s133
      %s135 = smul.u32 114, %s13
      %p136 = scmp.lt.s32.totalorder %s135, 227
      %s137 = scalar_select %p136, %s135, 227
      %s138 = smul.addr %s137, 8
      %s139 = scalar_lea.vmem %s1, %s138
      %s140 = smul.u32 114, %s13
      %s141 = smul.u32 114, %s13
      %p142 = scmp.lt.s32.totalorder %s141, 227
      %s143 = scalar_select %p142, %s141, 227
      %s144 = smul.addr %s143, 8
      %s145 = scalar_lea.vmem %s2, %s144
      %s146 = smul.u32 114, %s13
      %s147 = smul.u32 %s13, 912
      %s148 = scalar_lea.vmem %s0, %s147
      %v149 = vld [vmem:[%s148] sm:$0xff]
      %v150 = vld [vmem:[%s148 + $0x8] sm:$0xff]
      %v151 = vld [vmem:[%s148 + $0x10] sm:$0xff]
      %v152 = vld [vmem:[%s148 + $0x18] sm:$0xff]
      %v153 = vld [vmem:[%s148 + $0x20] sm:$0xff]
      %v154 = vld [vmem:[%s148 + $0x28] sm:$0xff]
      %v155 = vld [vmem:[%s148 + $0x30] sm:$0xff]
      %v156 = vld [vmem:[%s148 + $0x38] sm:$0xff]
      %v157 = vld [vmem:[%s148 + $0x40] sm:$0xff]
      %v158 = vld [vmem:[%s148 + $0x48] sm:$0xff]
      %v159 = vld [vmem:[%s148 + $0x50] sm:$0xff]
      %v160 = vld [vmem:[%s148 + $0x58] sm:$0xff]
      %v161 = vld [vmem:[%s148 + $0x60] sm:$0xff]
      %v162 = vld [vmem:[%s148 + $0x68] sm:$0xff]
      %v163 = vld [vmem:[%s148 + $0x70] sm:$0xff]
      %v164 = vld [vmem:[%s148 + $0x78] sm:$0xff]
      %v165 = vld [vmem:[%s148 + $0x80] sm:$0xff]
      %v166 = vld [vmem:[%s148 + $0x88] sm:$0xff]
      %v167 = vld [vmem:[%s148 + $0x90] sm:$0xff]
      %v168 = vld [vmem:[%s148 + $0x98] sm:$0xff]
      %v169 = vld [vmem:[%s148 + $0xa0] sm:$0xff]
      %v170 = vld [vmem:[%s148 + $0xa8] sm:$0xff]
      %v171 = vld [vmem:[%s148 + $0xb0] sm:$0xff]
      %v172 = vld [vmem:[%s148 + $0xb8] sm:$0xff]
      %v173 = vld [vmem:[%s148 + $0xc0] sm:$0xff]
      %v174 = vld [vmem:[%s148 + $0xc8] sm:$0xff]
      %v175 = vld [vmem:[%s148 + $0xd0] sm:$0xff]
      %v176 = vld [vmem:[%s148 + $0xd8] sm:$0xff]
      %v177 = vld [vmem:[%s148 + $0xe0] sm:$0xff]
      %v178 = vld [vmem:[%s148 + $0xe8] sm:$0xff]
      %v179 = vld [vmem:[%s148 + $0xf0] sm:$0xff]
      %v180 = vld [vmem:[%s148 + $0xf8] sm:$0xff]
      %v181 = vld [vmem:[%s148 + $0x100] sm:$0xff]
      %v182 = vld [vmem:[%s148 + $0x108] sm:$0xff]
      %v183 = vld [vmem:[%s148 + $0x110] sm:$0xff]
      %v184 = vld [vmem:[%s148 + $0x118] sm:$0xff]
      %v185 = vld [vmem:[%s148 + $0x120] sm:$0xff]
      %v186 = vld [vmem:[%s148 + $0x128] sm:$0xff]
      %v187 = vld [vmem:[%s148 + $0x130] sm:$0xff]
      %v188 = vld [vmem:[%s148 + $0x138] sm:$0xff]
      %v189 = vld [vmem:[%s148 + $0x140] sm:$0xff]
      %v190 = vld [vmem:[%s148 + $0x148] sm:$0xff]
      %v191 = vld [vmem:[%s148 + $0x150] sm:$0xff]
      %v192 = vld [vmem:[%s148 + $0x158] sm:$0xff]
      %v193 = vld [vmem:[%s148 + $0x160] sm:$0xff]
      %v194 = vld [vmem:[%s148 + $0x168] sm:$0xff]
      %v195 = vld [vmem:[%s148 + $0x170] sm:$0xff]
      %v196 = vld [vmem:[%s148 + $0x178] sm:$0xff]
      %v197 = vld [vmem:[%s148 + $0x180] sm:$0xff]
      %v198 = vld [vmem:[%s148 + $0x188] sm:$0xff]
      %v199 = vld [vmem:[%s148 + $0x190] sm:$0xff]
      %v200 = vld [vmem:[%s148 + $0x198] sm:$0xff]
      %v201 = vld [vmem:[%s148 + $0x1a0] sm:$0xff]
      %v202 = vld [vmem:[%s148 + $0x1a8] sm:$0xff]
      %v203 = vld [vmem:[%s148 + $0x1b0] sm:$0xff]
      %v204 = vld [vmem:[%s148 + $0x1b8] sm:$0xff]
      %v205 = vld [vmem:[%s148 + $0x1c0] sm:$0xff]
      %v206 = vld [vmem:[%s148 + $0x1c8] sm:$0xff]
      %v207 = vld [vmem:[%s148 + $0x1d0] sm:$0xff]
      %v208 = vld [vmem:[%s148 + $0x1d8] sm:$0xff]
      %v209 = vld [vmem:[%s148 + $0x1e0] sm:$0xff]
      %v210 = vld [vmem:[%s148 + $0x1e8] sm:$0xff]
      %v211 = vld [vmem:[%s148 + $0x1f0] sm:$0xff]
      %v212 = vld [vmem:[%s148 + $0x1f8] sm:$0xff]
      %v213 = vld [vmem:[%s148 + $0x200] sm:$0xff]
      %v214 = vld [vmem:[%s148 + $0x208] sm:$0xff]
      %v215 = vld [vmem:[%s148 + $0x210] sm:$0xff]
      %v216 = vld [vmem:[%s148 + $0x218] sm:$0xff]
      %v217 = vld [vmem:[%s148 + $0x220] sm:$0xff]
      %v218 = vld [vmem:[%s148 + $0x228] sm:$0xff]
      %v219 = vld [vmem:[%s148 + $0x230] sm:$0xff]
      %v220 = vld [vmem:[%s148 + $0x238] sm:$0xff]
      %v221 = vld [vmem:[%s148 + $0x240] sm:$0xff]
      %v222 = vld [vmem:[%s148 + $0x248] sm:$0xff]
      %v223 = vld [vmem:[%s148 + $0x250] sm:$0xff]
      %v224 = vld [vmem:[%s148 + $0x258] sm:$0xff]
      %v225 = vld [vmem:[%s148 + $0x260] sm:$0xff]
      %v226 = vld [vmem:[%s148 + $0x268] sm:$0xff]
      %v227 = vld [vmem:[%s148 + $0x270] sm:$0xff]
      %v228 = vld [vmem:[%s148 + $0x278] sm:$0xff]
      %v229 = vld [vmem:[%s148 + $0x280] sm:$0xff]
      %v230 = vld [vmem:[%s148 + $0x288] sm:$0xff]
      %v231 = vld [vmem:[%s148 + $0x290] sm:$0xff]
      %v232 = vld [vmem:[%s148 + $0x298] sm:$0xff]
      %v233 = vld [vmem:[%s148 + $0x2a0] sm:$0xff]
      %v234 = vld [vmem:[%s148 + $0x2a8] sm:$0xff]
      %v235 = vld [vmem:[%s148 + $0x2b0] sm:$0xff]
      %v236 = vld [vmem:[%s148 + $0x2b8] sm:$0xff]
      %v237 = vld [vmem:[%s148 + $0x2c0] sm:$0xff]
      %v238 = vld [vmem:[%s148 + $0x2c8] sm:$0xff]
      %v239 = vld [vmem:[%s148 + $0x2d0] sm:$0xff]
      %v240 = vld [vmem:[%s148 + $0x2d8] sm:$0xff]
      %v241 = vld [vmem:[%s148 + $0x2e0] sm:$0xff]
      %v242 = vld [vmem:[%s148 + $0x2e8] sm:$0xff]
      %v243 = vld [vmem:[%s148 + $0x2f0] sm:$0xff]
      %v244 = vld [vmem:[%s148 + $0x2f8] sm:$0xff]
      %v245 = vld [vmem:[%s148 + $0x300] sm:$0xff]
      %v246 = vld [vmem:[%s148 + $0x308] sm:$0xff]
      %v247 = vld [vmem:[%s148 + $0x310] sm:$0xff]
      %v248 = vld [vmem:[%s148 + $0x318] sm:$0xff]
      %v249 = vld [vmem:[%s148 + $0x320] sm:$0xff]
      %v250 = vld [vmem:[%s148 + $0x328] sm:$0xff]
      %v251 = vld [vmem:[%s148 + $0x330] sm:$0xff]
      %v252 = vld [vmem:[%s148 + $0x338] sm:$0xff]
      %v253 = vld [vmem:[%s148 + $0x340] sm:$0xff]
      %v254 = vld [vmem:[%s148 + $0x348] sm:$0xff]
      %v255 = vld [vmem:[%s148 + $0x350] sm:$0xff]
      %v256 = vld [vmem:[%s148 + $0x358] sm:$0xff]
      %v257 = vld [vmem:[%s148 + $0x360] sm:$0xff]
      %v258 = vld [vmem:[%s148 + $0x368] sm:$0xff]
      %v259 = vld [vmem:[%s148 + $0x370] sm:$0xff]
      %v260 = vld [vmem:[%s148 + $0x378] sm:$0xff]
      %v261 = vld [vmem:[%s148 + $0x380] sm:$0xff]
      %v262 = vld [vmem:[%s148 + $0x388] sm:$0xff]
      %v263 = vxor.u32 %v149, 2147483648
      %v264 = vxor.u32 %v150, 2147483648
      %v265 = vxor.u32 %v151, 2147483648
      %v266 = vxor.u32 %v152, 2147483648
      %v267 = vxor.u32 %v153, 2147483648
      %v268 = vxor.u32 %v154, 2147483648
      %v269 = vxor.u32 %v155, 2147483648
      %v270 = vxor.u32 %v156, 2147483648
      %v271 = vxor.u32 %v157, 2147483648
      %v272 = vxor.u32 %v158, 2147483648
      %v273 = vxor.u32 %v159, 2147483648
      %v274 = vxor.u32 %v160, 2147483648
      %v275 = vxor.u32 %v161, 2147483648
      %v276 = vxor.u32 %v162, 2147483648
      %v277 = vxor.u32 %v163, 2147483648
      %v278 = vxor.u32 %v164, 2147483648
      %v279 = vxor.u32 %v165, 2147483648
      %v280 = vxor.u32 %v166, 2147483648
      %v281 = vxor.u32 %v167, 2147483648
      %v282 = vxor.u32 %v168, 2147483648
      %v283 = vxor.u32 %v169, 2147483648
      %v284 = vxor.u32 %v170, 2147483648
      %v285 = vxor.u32 %v171, 2147483648
      %v286 = vxor.u32 %v172, 2147483648
      %v287 = vxor.u32 %v173, 2147483648
      %v288 = vxor.u32 %v174, 2147483648
      %v289 = vxor.u32 %v175, 2147483648
      %v290 = vxor.u32 %v176, 2147483648
      %v291 = vxor.u32 %v177, 2147483648
      %v292 = vxor.u32 %v178, 2147483648
      %v293 = vxor.u32 %v179, 2147483648
      %v294 = vxor.u32 %v180, 2147483648
      %v295 = vxor.u32 %v181, 2147483648
      %v296 = vxor.u32 %v182, 2147483648
      %v297 = vxor.u32 %v183, 2147483648
      %v298 = vxor.u32 %v184, 2147483648
      %v299 = vxor.u32 %v185, 2147483648
      %v300 = vxor.u32 %v186, 2147483648
      %v301 = vxor.u32 %v187, 2147483648
      %v302 = vxor.u32 %v188, 2147483648
      %v303 = vxor.u32 %v189, 2147483648
      %v304 = vxor.u32 %v190, 2147483648
      %v305 = vxor.u32 %v191, 2147483648
      %v306 = vxor.u32 %v192, 2147483648
      %v307 = vxor.u32 %v193, 2147483648
      %v308 = vxor.u32 %v194, 2147483648
      %v309 = vxor.u32 %v195, 2147483648
      %v310 = vxor.u32 %v196, 2147483648
      %v311 = vxor.u32 %v197, 2147483648
      %v312 = vxor.u32 %v198, 2147483648
      %v313 = vxor.u32 %v199, 2147483648
      %v314 = vxor.u32 %v200, 2147483648
      %v315 = vxor.u32 %v201, 2147483648
      %v316 = vxor.u32 %v202, 2147483648
      %v317 = vxor.u32 %v203, 2147483648
      %v318 = vxor.u32 %v204, 2147483648
      %v319 = vxor.u32 %v205, 2147483648
      %v320 = vxor.u32 %v206, 2147483648
      %v321 = vxor.u32 %v207, 2147483648
      %v322 = vxor.u32 %v208, 2147483648
      %v323 = vxor.u32 %v209, 2147483648
      %v324 = vxor.u32 %v210, 2147483648
      %v325 = vxor.u32 %v211, 2147483648
      %v326 = vxor.u32 %v212, 2147483648
      %v327 = vxor.u32 %v213, 2147483648
      %v328 = vxor.u32 %v214, 2147483648
      %v329 = vxor.u32 %v215, 2147483648
      %v330 = vxor.u32 %v216, 2147483648
      %v331 = vxor.u32 %v217, 2147483648
      %v332 = vxor.u32 %v218, 2147483648
      %v333 = vxor.u32 %v219, 2147483648
      %v334 = vxor.u32 %v220, 2147483648
      %v335 = vxor.u32 %v221, 2147483648
      %v336 = vxor.u32 %v222, 2147483648
      %v337 = vxor.u32 %v223, 2147483648
      %v338 = vxor.u32 %v224, 2147483648
      %v339 = vxor.u32 %v225, 2147483648
      %v340 = vxor.u32 %v226, 2147483648
      %v341 = vxor.u32 %v227, 2147483648
      %v342 = vxor.u32 %v228, 2147483648
      %v343 = vxor.u32 %v229, 2147483648
      %v344 = vxor.u32 %v230, 2147483648
      %v345 = vxor.u32 %v231, 2147483648
      %v346 = vxor.u32 %v232, 2147483648
      %v347 = vxor.u32 %v233, 2147483648
      %v348 = vxor.u32 %v234, 2147483648
      %v349 = vxor.u32 %v235, 2147483648
      %v350 = vxor.u32 %v236, 2147483648
      %v351 = vxor.u32 %v237, 2147483648
      %v352 = vxor.u32 %v238, 2147483648
      %v353 = vxor.u32 %v239, 2147483648
      %v354 = vxor.u32 %v240, 2147483648
      %v355 = vxor.u32 %v241, 2147483648
      %v356 = vxor.u32 %v242, 2147483648
      %v357 = vxor.u32 %v243, 2147483648
      %v358 = vxor.u32 %v244, 2147483648
      %v359 = vxor.u32 %v245, 2147483648
      %v360 = vxor.u32 %v246, 2147483648
      %v361 = vxor.u32 %v247, 2147483648
      %v362 = vxor.u32 %v248, 2147483648
      %v363 = vxor.u32 %v249, 2147483648
      %v364 = vxor.u32 %v250, 2147483648
      %v365 = vxor.u32 %v251, 2147483648
      %v366 = vxor.u32 %v252, 2147483648
      %v367 = vxor.u32 %v253, 2147483648
      %v368 = vxor.u32 %v254, 2147483648
      %v369 = vxor.u32 %v255, 2147483648
      %v370 = vxor.u32 %v256, 2147483648
      %v371 = vxor.u32 %v257, 2147483648
      %v372 = vxor.u32 %v258, 2147483648
      %v373 = vxor.u32 %v259, 2147483648
      %v374 = vxor.u32 %v260, 2147483648
      %v375 = vxor.u32 %v261, 2147483648
      %v376 = vxor.u32 %v262, 2147483648
      %v377 = vmul.f32 %v263, 1.442695
      %v378 = vpow.pop %v377
      %v379 = vmul.f32 %v264, 1.442695
      %v380 = vpow.pop %v379
      %v381 = vmul.f32 %v265, 1.442695
      %v382 = vpow.pop %v381
      %v383 = vmul.f32 %v266, 1.442695
      %v384 = vpow.pop %v383
      %v385 = vmul.f32 %v267, 1.442695
      %v386 = vpow.pop %v385
      %v387 = vmul.f32 %v268, 1.442695
      %v388 = vpow.pop %v387
      %v389 = vmul.f32 %v269, 1.442695
      %v390 = vpow.pop %v389
      %v391 = vmul.f32 %v270, 1.442695
      %v392 = vpow.pop %v391
      %v393 = vmul.f32 %v271, 1.442695
      %v394 = vpow.pop %v393
      %v395 = vmul.f32 %v272, 1.442695
      %v396 = vpow.pop %v395
      %v397 = vmul.f32 %v273, 1.442695
      %v398 = vpow.pop %v397
      %v399 = vmul.f32 %v274, 1.442695
      %v400 = vpow.pop %v399
      %v401 = vmul.f32 %v275, 1.442695
      %v402 = vpow.pop %v401
      %v403 = vmul.f32 %v276, 1.442695
      %v404 = vpow.pop %v403
      %v405 = vmul.f32 %v277, 1.442695
      %v406 = vpow.pop %v405
      %v407 = vmul.f32 %v278, 1.442695
      %v408 = vpow.pop %v407
      %v409 = vmul.f32 %v279, 1.442695
      %v410 = vpow.pop %v409
      %v411 = vmul.f32 %v280, 1.442695
      %v412 = vpow.pop %v411
      %v413 = vmul.f32 %v281, 1.442695
      %v414 = vpow.pop %v413
      %v415 = vmul.f32 %v282, 1.442695
      %v416 = vpow.pop %v415
      %v417 = vmul.f32 %v283, 1.442695
      %v418 = vpow.pop %v417
      %v419 = vmul.f32 %v284, 1.442695
      %v420 = vpow.pop %v419
      %v421 = vmul.f32 %v285, 1.442695
      %v422 = vpow.pop %v421
      %v423 = vmul.f32 %v286, 1.442695
      %v424 = vpow.pop %v423
      %v425 = vmul.f32 %v287, 1.442695
      %v426 = vpow.pop %v425
      %v427 = vmul.f32 %v288, 1.442695
      %v428 = vpow.pop %v427
      %v429 = vmul.f32 %v289, 1.442695
      %v430 = vpow.pop %v429
      %v431 = vmul.f32 %v290, 1.442695
      %v432 = vpow.pop %v431
      %v433 = vmul.f32 %v291, 1.442695
      %v434 = vpow.pop %v433
      %v435 = vmul.f32 %v292, 1.442695
      %v436 = vpow.pop %v435
      %v437 = vmul.f32 %v293, 1.442695
      %v438 = vpow.pop %v437
      %v439 = vmul.f32 %v294, 1.442695
      %v440 = vpow.pop %v439
      %v441 = vmul.f32 %v295, 1.442695
      %v442 = vpow.pop %v441
      %v443 = vmul.f32 %v296, 1.442695
      %v444 = vpow.pop %v443
      %v445 = vmul.f32 %v297, 1.442695
      %v446 = vpow.pop %v445
      %v447 = vmul.f32 %v298, 1.442695
      %v448 = vpow.pop %v447
      %v449 = vmul.f32 %v299, 1.442695
      %v450 = vpow.pop %v449
      %v451 = vmul.f32 %v300, 1.442695
      %v452 = vpow.pop %v451
      %v453 = vmul.f32 %v301, 1.442695
      %v454 = vpow.pop %v453
      %v455 = vmul.f32 %v302, 1.442695
      %v456 = vpow.pop %v455
      %v457 = vmul.f32 %v303, 1.442695
      %v458 = vpow.pop %v457
      %v459 = vmul.f32 %v304, 1.442695
      %v460 = vpow.pop %v459
      %v461 = vmul.f32 %v305, 1.442695
      %v462 = vpow.pop %v461
      %v463 = vmul.f32 %v306, 1.442695
      %v464 = vpow.pop %v463
      %v465 = vmul.f32 %v307, 1.442695
      %v466 = vpow.pop %v465
      %v467 = vmul.f32 %v308, 1.442695
      %v468 = vpow.pop %v467
      %v469 = vmul.f32 %v309, 1.442695
      %v470 = vpow.pop %v469
      %v471 = vmul.f32 %v310, 1.442695
      %v472 = vpow.pop %v471
      %v473 = vmul.f32 %v311, 1.442695
      %v474 = vpow.pop %v473
      %v475 = vmul.f32 %v312, 1.442695
      %v476 = vpow.pop %v475
      %v477 = vmul.f32 %v313, 1.442695
      %v478 = vpow.pop %v477
      %v479 = vmul.f32 %v314, 1.442695
      %v480 = vpow.pop %v479
      %v481 = vmul.f32 %v315, 1.442695
      %v482 = vpow.pop %v481
      %v483 = vmul.f32 %v316, 1.442695
      %v484 = vpow.pop %v483
      %v485 = vmul.f32 %v317, 1.442695
      %v486 = vpow.pop %v485
      %v487 = vmul.f32 %v318, 1.442695
      %v488 = vpow.pop %v487
      %v489 = vmul.f32 %v319, 1.442695
      %v490 = vpow.pop %v489
      %v491 = vmul.f32 %v320, 1.442695
      %v492 = vpow.pop %v491
      %v493 = vmul.f32 %v321, 1.442695
      %v494 = vpow.pop %v493
      %v495 = vmul.f32 %v322, 1.442695
      %v496 = vpow.pop %v495
      %v497 = vmul.f32 %v323, 1.442695
      %v498 = vpow.pop %v497
      %v499 = vmul.f32 %v324, 1.442695
      %v500 = vpow.pop %v499
      %v501 = vmul.f32 %v325, 1.442695
      %v502 = vpow.pop %v501
      %v503 = vmul.f32 %v326, 1.442695
      %v504 = vpow.pop %v503
      %v505 = vmul.f32 %v327, 1.442695
      %v506 = vpow.pop %v505
      %v507 = vmul.f32 %v328, 1.442695
      %v508 = vpow.pop %v507
      %v509 = vmul.f32 %v329, 1.442695
      %v510 = vpow.pop %v509
      %v511 = vmul.f32 %v330, 1.442695
      %v512 = vpow.pop %v511
      %v513 = vmul.f32 %v331, 1.442695
      %v514 = vpow.pop %v513
      %v515 = vmul.f32 %v332, 1.442695
      %v516 = vpow.pop %v515
      %v517 = vmul.f32 %v333, 1.442695
      %v518 = vpow.pop %v517
      %v519 = vmul.f32 %v334, 1.442695
      %v520 = vpow.pop %v519
      %v521 = vmul.f32 %v335, 1.442695
      %v522 = vpow.pop %v521
      %v523 = vmul.f32 %v336, 1.442695
      %v524 = vpow.pop %v523
      %v525 = vmul.f32 %v337, 1.442695
      %v526 = vpow.pop %v525
      %v527 = vmul.f32 %v338, 1.442695
      %v528 = vpow.pop %v527
      %v529 = vmul.f32 %v339, 1.442695
      %v530 = vpow.pop %v529
      %v531 = vmul.f32 %v340, 1.442695
      %v532 = vpow.pop %v531
      %v533 = vmul.f32 %v341, 1.442695
      %v534 = vpow.pop %v533
      %v535 = vmul.f32 %v342, 1.442695
      %v536 = vpow.pop %v535
      %v537 = vmul.f32 %v343, 1.442695
      %v538 = vpow.pop %v537
      %v539 = vmul.f32 %v344, 1.442695
      %v540 = vpow.pop %v539
      %v541 = vmul.f32 %v345, 1.442695
      %v542 = vpow.pop %v541
      %v543 = vmul.f32 %v346, 1.442695
      %v544 = vpow.pop %v543
      %v545 = vmul.f32 %v347, 1.442695
      %v546 = vpow.pop %v545
      %v547 = vmul.f32 %v348, 1.442695
      %v548 = vpow.pop %v547
      %v549 = vmul.f32 %v349, 1.442695
      %v550 = vpow.pop %v549
      %v551 = vmul.f32 %v350, 1.442695
      %v552 = vpow.pop %v551
      %v553 = vmul.f32 %v351, 1.442695
      %v554 = vpow.pop %v553
      %v555 = vmul.f32 %v352, 1.442695
      %v556 = vpow.pop %v555
      %v557 = vmul.f32 %v353, 1.442695
      %v558 = vpow.pop %v557
      %v559 = vmul.f32 %v354, 1.442695
      %v560 = vpow.pop %v559
      %v561 = vmul.f32 %v355, 1.442695
      %v562 = vpow.pop %v561
      %v563 = vmul.f32 %v356, 1.442695
      %v564 = vpow.pop %v563
      %v565 = vmul.f32 %v357, 1.442695
      %v566 = vpow.pop %v565
      %v567 = vmul.f32 %v358, 1.442695
      %v568 = vpow.pop %v567
      %v569 = vmul.f32 %v359, 1.442695
      %v570 = vpow.pop %v569
      %v571 = vmul.f32 %v360, 1.442695
      %v572 = vpow.pop %v571
      %v573 = vmul.f32 %v361, 1.442695
      %v574 = vpow.pop %v573
      %v575 = vmul.f32 %v362, 1.442695
      %v576 = vpow.pop %v575
      %v577 = vmul.f32 %v363, 1.442695
      %v578 = vpow.pop %v577
      %v579 = vmul.f32 %v364, 1.442695
      %v580 = vpow.pop %v579
      %v581 = vmul.f32 %v365, 1.442695
      %v582 = vpow.pop %v581
      %v583 = vmul.f32 %v366, 1.442695
      %v584 = vpow.pop %v583
      %v585 = vmul.f32 %v367, 1.442695
      %v586 = vpow.pop %v585
      %v587 = vmul.f32 %v368, 1.442695
      %v588 = vpow.pop %v587
      %v589 = vmul.f32 %v369, 1.442695
      %v590 = vpow.pop %v589
      %v591 = vmul.f32 %v370, 1.442695
      %v592 = vpow.pop %v591
      %v593 = vmul.f32 %v371, 1.442695
      %v594 = vpow.pop %v593
      %v595 = vmul.f32 %v372, 1.442695
      %v596 = vpow.pop %v595
      %v597 = vmul.f32 %v373, 1.442695
      %v598 = vpow.pop %v597
      %v599 = vmul.f32 %v374, 1.442695
      %v600 = vpow.pop %v599
      %v601 = vmul.f32 %v375, 1.442695
      %v602 = vpow.pop %v601
      %v603 = vmul.f32 %v376, 1.442695
      %v604 = vpow.pop %v603
      %v605 = vadd.f32 %v378, 1.0
      %v606 = vadd.f32 %v380, 1.0
      %v607 = vadd.f32 %v382, 1.0
      %v608 = vadd.f32 %v384, 1.0
      %v609 = vadd.f32 %v386, 1.0
      %v610 = vadd.f32 %v388, 1.0
      %v611 = vadd.f32 %v390, 1.0
      %v612 = vadd.f32 %v392, 1.0
      %v613 = vadd.f32 %v394, 1.0
      %v614 = vadd.f32 %v396, 1.0
      %v615 = vadd.f32 %v398, 1.0
      %v616 = vadd.f32 %v400, 1.0
      %v617 = vadd.f32 %v402, 1.0
      %v618 = vadd.f32 %v404, 1.0
      %v619 = vadd.f32 %v406, 1.0
      %v620 = vadd.f32 %v408, 1.0
      %v621 = vadd.f32 %v410, 1.0
      %v622 = vadd.f32 %v412, 1.0
      %v623 = vadd.f32 %v414, 1.0
      %v624 = vadd.f32 %v416, 1.0
      %v625 = vadd.f32 %v418, 1.0
      %v626 = vadd.f32 %v420, 1.0
      %v627 = vadd.f32 %v422, 1.0
      %v628 = vadd.f32 %v424, 1.0
      %v629 = vadd.f32 %v426, 1.0
      %v630 = vadd.f32 %v428, 1.0
      %v631 = vadd.f32 %v430, 1.0
      %v632 = vadd.f32 %v432, 1.0
      %v633 = vadd.f32 %v434, 1.0
      %v634 = vadd.f32 %v436, 1.0
      %v635 = vadd.f32 %v438, 1.0
      %v636 = vadd.f32 %v440, 1.0
      %v637 = vadd.f32 %v442, 1.0
      %v638 = vadd.f32 %v444, 1.0
      %v639 = vadd.f32 %v446, 1.0
      %v640 = vadd.f32 %v448, 1.0
      %v641 = vadd.f32 %v450, 1.0
      %v642 = vadd.f32 %v452, 1.0
      %v643 = vadd.f32 %v454, 1.0
      %v644 = vadd.f32 %v456, 1.0
      %v645 = vadd.f32 %v458, 1.0
      %v646 = vadd.f32 %v460, 1.0
      %v647 = vadd.f32 %v462, 1.0
      %v648 = vadd.f32 %v464, 1.0
      %v649 = vadd.f32 %v466, 1.0
      %v650 = vadd.f32 %v468, 1.0
      %v651 = vadd.f32 %v470, 1.0
      %v652 = vadd.f32 %v472, 1.0
      %v653 = vadd.f32 %v474, 1.0
      %v654 = vadd.f32 %v476, 1.0
      %v655 = vadd.f32 %v478, 1.0
      %v656 = vadd.f32 %v480, 1.0
      %v657 = vadd.f32 %v482, 1.0
      %v658 = vadd.f32 %v484, 1.0
      %v659 = vadd.f32 %v486, 1.0
      %v660 = vadd.f32 %v488, 1.0
      %v661 = vadd.f32 %v490, 1.0
      %v662 = vadd.f32 %v492, 1.0
      %v663 = vadd.f32 %v494, 1.0
      %v664 = vadd.f32 %v496, 1.0
      %v665 = vadd.f32 %v498, 1.0
      %v666 = vadd.f32 %v500, 1.0
      %v667 = vadd.f32 %v502, 1.0
      %v668 = vadd.f32 %v504, 1.0
      %v669 = vadd.f32 %v506, 1.0
      %v670 = vadd.f32 %v508, 1.0
      %v671 = vadd.f32 %v510, 1.0
      %v672 = vadd.f32 %v512, 1.0
      %v673 = vadd.f32 %v514, 1.0
      %v674 = vadd.f32 %v516, 1.0
      %v675 = vadd.f32 %v518, 1.0
      %v676 = vadd.f32 %v520, 1.0
      %v677 = vadd.f32 %v522, 1.0
      %v678 = vadd.f32 %v524, 1.0
      %v679 = vadd.f32 %v526, 1.0
      %v680 = vadd.f32 %v528, 1.0
      %v681 = vadd.f32 %v530, 1.0
      %v682 = vadd.f32 %v532, 1.0
      %v683 = vadd.f32 %v534, 1.0
      %v684 = vadd.f32 %v536, 1.0
      %v685 = vadd.f32 %v538, 1.0
      %v686 = vadd.f32 %v540, 1.0
      %v687 = vadd.f32 %v542, 1.0
      %v688 = vadd.f32 %v544, 1.0
      %v689 = vadd.f32 %v546, 1.0
      %v690 = vadd.f32 %v548, 1.0
      %v691 = vadd.f32 %v550, 1.0
      %v692 = vadd.f32 %v552, 1.0
      %v693 = vadd.f32 %v554, 1.0
      %v694 = vadd.f32 %v556, 1.0
      %v695 = vadd.f32 %v558, 1.0
      %v696 = vadd.f32 %v560, 1.0
      %v697 = vadd.f32 %v562, 1.0
      %v698 = vadd.f32 %v564, 1.0
      %v699 = vadd.f32 %v566, 1.0
      %v700 = vadd.f32 %v568, 1.0
      %v701 = vadd.f32 %v570, 1.0
      %v702 = vadd.f32 %v572, 1.0
      %v703 = vadd.f32 %v574, 1.0
      %v704 = vadd.f32 %v576, 1.0
      %v705 = vadd.f32 %v578, 1.0
      %v706 = vadd.f32 %v580, 1.0
      %v707 = vadd.f32 %v582, 1.0
      %v708 = vadd.f32 %v584, 1.0
      %v709 = vadd.f32 %v586, 1.0
      %v710 = vadd.f32 %v588, 1.0
      %v711 = vadd.f32 %v590, 1.0
      %v712 = vadd.f32 %v592, 1.0
      %v713 = vadd.f32 %v594, 1.0
      %v714 = vadd.f32 %v596, 1.0
      %v715 = vadd.f32 %v598, 1.0
      %v716 = vadd.f32 %v600, 1.0
      %v717 = vadd.f32 %v602, 1.0
      %v718 = vadd.f32 %v604, 1.0
      %v719 = vrcp.pop %v605
      %v720 = vmul.f32 %v605, %v719
      %v721 = vsub.f32 1.0, %v720
      %v722 = vmul.f32 %v719, %v721
      %v723 = vadd.f32 %v719, %v722
      %vm724 = vweird.f32 %v605
      %vm725 = vweird.f32 %v719
      %vm726 = vmor %vm724, %vm725
      %v727 = vsel %vm726, %v719, %v723
      %v728 = vand.u32 2147483647, %v605
      %vm729 = vcmp.eq.f32.partialorder %v728, 8.507059e+37
      %v730 = vand.u32 %v605, 2147483648
      %v731 = vor.u32 1.1754944e-38, %v730
      %v732 = vsel %vm729, %v731, %v727
      %v733 = vmul.f32 1.0, %v732
      %v734 = vrcp.pop %v606
      %v735 = vmul.f32 %v606, %v734
      %v736 = vsub.f32 1.0, %v735
      %v737 = vmul.f32 %v734, %v736
      %v738 = vadd.f32 %v734, %v737
      %vm739 = vweird.f32 %v606
      %vm740 = vweird.f32 %v734
      %vm741 = vmor %vm739, %vm740
      %v742 = vsel %vm741, %v734, %v738
      %v743 = vand.u32 2147483647, %v606
      %vm744 = vcmp.eq.f32.partialorder %v743, 8.507059e+37
      %v745 = vand.u32 %v606, 2147483648
      %v746 = vor.u32 1.1754944e-38, %v745
      %v747 = vsel %vm744, %v746, %v742
      %v748 = vmul.f32 1.0, %v747
      %v749 = vrcp.pop %v607
      %v750 = vmul.f32 %v607, %v749
      %v751 = vsub.f32 1.0, %v750
      %v752 = vmul.f32 %v749, %v751
      %v753 = vadd.f32 %v749, %v752
      %vm754 = vweird.f32 %v607
      %vm755 = vweird.f32 %v749
      %vm756 = vmor %vm754, %vm755
      %v757 = vsel %vm756, %v749, %v753
      %v758 = vand.u32 2147483647, %v607
      %vm759 = vcmp.eq.f32.partialorder %v758, 8.507059e+37
      %v760 = vand.u32 %v607, 2147483648
      %v761 = vor.u32 1.1754944e-38, %v760
      %v762 = vsel %vm759, %v761, %v757
      %v763 = vmul.f32 1.0, %v762
      %v764 = vrcp.pop %v608
      %v765 = vmul.f32 %v608, %v764
      %v766 = vsub.f32 1.0, %v765
      %v767 = vmul.f32 %v764, %v766
      %v768 = vadd.f32 %v764, %v767
      %vm769 = vweird.f32 %v608
      %vm770 = vweird.f32 %v764
      %vm771 = vmor %vm769, %vm770
      %v772 = vsel %vm771, %v764, %v768
      %v773 = vand.u32 2147483647, %v608
      %vm774 = vcmp.eq.f32.partialorder %v773, 8.507059e+37
      %v775 = vand.u32 %v608, 2147483648
      %v776 = vor.u32 1.1754944e-38, %v775
      %v777 = vsel %vm774, %v776, %v772
      %v778 = vmul.f32 1.0, %v777
      %v779 = vrcp.pop %v609
      %v780 = vmul.f32 %v609, %v779
      %v781 = vsub.f32 1.0, %v780
      %v782 = vmul.f32 %v779, %v781
      %v783 = vadd.f32 %v779, %v782
      %vm784 = vweird.f32 %v609
      %vm785 = vweird.f32 %v779
      %vm786 = vmor %vm784, %vm785
      %v787 = vsel %vm786, %v779, %v783
      %v788 = vand.u32 2147483647, %v609
      %vm789 = vcmp.eq.f32.partialorder %v788, 8.507059e+37
      %v790 = vand.u32 %v609, 2147483648
      %v791 = vor.u32 1.1754944e-38, %v790
      %v792 = vsel %vm789, %v791, %v787
      %v793 = vmul.f32 1.0, %v792
      %v794 = vrcp.pop %v610
      %v795 = vmul.f32 %v610, %v794
      %v796 = vsub.f32 1.0, %v795
      %v797 = vmul.f32 %v794, %v796
      %v798 = vadd.f32 %v794, %v797
      %vm799 = vweird.f32 %v610
      %vm800 = vweird.f32 %v794
      %vm801 = vmor %vm799, %vm800
      %v802 = vsel %vm801, %v794, %v798
      %v803 = vand.u32 2147483647, %v610
      %vm804 = vcmp.eq.f32.partialorder %v803, 8.507059e+37
      %v805 = vand.u32 %v610, 2147483648
      %v806 = vor.u32 1.1754944e-38, %v805
      %v807 = vsel %vm804, %v806, %v802
      %v808 = vmul.f32 1.0, %v807
      %v809 = vrcp.pop %v611
      %v810 = vmul.f32 %v611, %v809
      %v811 = vsub.f32 1.0, %v810
      %v812 = vmul.f32 %v809, %v811
      %v813 = vadd.f32 %v809, %v812
      %vm814 = vweird.f32 %v611
      %vm815 = vweird.f32 %v809
      %vm816 = vmor %vm814, %vm815
      %v817 = vsel %vm816, %v809, %v813
      %v818 = vand.u32 2147483647, %v611
      %vm819 = vcmp.eq.f32.partialorder %v818, 8.507059e+37
      %v820 = vand.u32 %v611, 2147483648
      %v821 = vor.u32 1.1754944e-38, %v820
      %v822 = vsel %vm819, %v821, %v817
      %v823 = vmul.f32 1.0, %v822
      %v824 = vrcp.pop %v612
      %v825 = vmul.f32 %v612, %v824
      %v826 = vsub.f32 1.0, %v825
      %v827 = vmul.f32 %v824, %v826
      %v828 = vadd.f32 %v824, %v827
      %vm829 = vweird.f32 %v612
      %vm830 = vweird.f32 %v824
      %vm831 = vmor %vm829, %vm830
      %v832 = vsel %vm831, %v824, %v828
      %v833 = vand.u32 2147483647, %v612
      %vm834 = vcmp.eq.f32.partialorder %v833, 8.507059e+37
      %v835 = vand.u32 %v612, 2147483648
      %v836 = vor.u32 1.1754944e-38, %v835
      %v837 = vsel %vm834, %v836, %v832
      %v838 = vmul.f32 1.0, %v837
      %v839 = vrcp.pop %v613
      %v840 = vmul.f32 %v613, %v839
      %v841 = vsub.f32 1.0, %v840
      %v842 = vmul.f32 %v839, %v841
      %v843 = vadd.f32 %v839, %v842
      %vm844 = vweird.f32 %v613
      %vm845 = vweird.f32 %v839
      %vm846 = vmor %vm844, %vm845
      %v847 = vsel %vm846, %v839, %v843
      %v848 = vand.u32 2147483647, %v613
      %vm849 = vcmp.eq.f32.partialorder %v848, 8.507059e+37
      %v850 = vand.u32 %v613, 2147483648
      %v851 = vor.u32 1.1754944e-38, %v850
      %v852 = vsel %vm849, %v851, %v847
      %v853 = vmul.f32 1.0, %v852
      %v854 = vrcp.pop %v614
      %v855 = vmul.f32 %v614, %v854
      %v856 = vsub.f32 1.0, %v855
      %v857 = vmul.f32 %v854, %v856
      %v858 = vadd.f32 %v854, %v857
      %vm859 = vweird.f32 %v614
      %vm860 = vweird.f32 %v854
      %vm861 = vmor %vm859, %vm860
      %v862 = vsel %vm861, %v854, %v858
      %v863 = vand.u32 2147483647, %v614
      %vm864 = vcmp.eq.f32.partialorder %v863, 8.507059e+37
      %v865 = vand.u32 %v614, 2147483648
      %v866 = vor.u32 1.1754944e-38, %v865
      %v867 = vsel %vm864, %v866, %v862
      %v868 = vmul.f32 1.0, %v867
      %v869 = vrcp.pop %v615
      %v870 = vmul.f32 %v615, %v869
      %v871 = vsub.f32 1.0, %v870
      %v872 = vmul.f32 %v869, %v871
      %v873 = vadd.f32 %v869, %v872
      %vm874 = vweird.f32 %v615
      %vm875 = vweird.f32 %v869
      %vm876 = vmor %vm874, %vm875
      %v877 = vsel %vm876, %v869, %v873
      %v878 = vand.u32 2147483647, %v615
      %vm879 = vcmp.eq.f32.partialorder %v878, 8.507059e+37
      %v880 = vand.u32 %v615, 2147483648
      %v881 = vor.u32 1.1754944e-38, %v880
      %v882 = vsel %vm879, %v881, %v877
      %v883 = vmul.f32 1.0, %v882
      %v884 = vrcp.pop %v616
      %v885 = vmul.f32 %v616, %v884
      %v886 = vsub.f32 1.0, %v885
      %v887 = vmul.f32 %v884, %v886
      %v888 = vadd.f32 %v884, %v887
      %vm889 = vweird.f32 %v616
      %vm890 = vweird.f32 %v884
      %vm891 = vmor %vm889, %vm890
      %v892 = vsel %vm891, %v884, %v888
      %v893 = vand.u32 2147483647, %v616
      %vm894 = vcmp.eq.f32.partialorder %v893, 8.507059e+37
      %v895 = vand.u32 %v616, 2147483648
      %v896 = vor.u32 1.1754944e-38, %v895
      %v897 = vsel %vm894, %v896, %v892
      %v898 = vmul.f32 1.0, %v897
      %v899 = vrcp.pop %v617
      %v900 = vmul.f32 %v617, %v899
      %v901 = vsub.f32 1.0, %v900
      %v902 = vmul.f32 %v899, %v901
      %v903 = vadd.f32 %v899, %v902
      %vm904 = vweird.f32 %v617
      %vm905 = vweird.f32 %v899
      %vm906 = vmor %vm904, %vm905
      %v907 = vsel %vm906, %v899, %v903
      %v908 = vand.u32 2147483647, %v617
      %vm909 = vcmp.eq.f32.partialorder %v908, 8.507059e+37
      %v910 = vand.u32 %v617, 2147483648
      %v911 = vor.u32 1.1754944e-38, %v910
      %v912 = vsel %vm909, %v911, %v907
      %v913 = vmul.f32 1.0, %v912
      %v914 = vrcp.pop %v618
      %v915 = vmul.f32 %v618, %v914
      %v916 = vsub.f32 1.0, %v915
      %v917 = vmul.f32 %v914, %v916
      %v918 = vadd.f32 %v914, %v917
      %vm919 = vweird.f32 %v618
      %vm920 = vweird.f32 %v914
      %vm921 = vmor %vm919, %vm920
      %v922 = vsel %vm921, %v914, %v918
      %v923 = vand.u32 2147483647, %v618
      %vm924 = vcmp.eq.f32.partialorder %v923, 8.507059e+37
      %v925 = vand.u32 %v618, 2147483648
      %v926 = vor.u32 1.1754944e-38, %v925
      %v927 = vsel %vm924, %v926, %v922
      %v928 = vmul.f32 1.0, %v927
      %v929 = vrcp.pop %v619
      %v930 = vmul.f32 %v619, %v929
      %v931 = vsub.f32 1.0, %v930
      %v932 = vmul.f32 %v929, %v931
      %v933 = vadd.f32 %v929, %v932
      %vm934 = vweird.f32 %v619
      %vm935 = vweird.f32 %v929
      %vm936 = vmor %vm934, %vm935
      %v937 = vsel %vm936, %v929, %v933
      %v938 = vand.u32 2147483647, %v619
      %vm939 = vcmp.eq.f32.partialorder %v938, 8.507059e+37
      %v940 = vand.u32 %v619, 2147483648
      %v941 = vor.u32 1.1754944e-38, %v940
      %v942 = vsel %vm939, %v941, %v937
      %v943 = vmul.f32 1.0, %v942
      %v944 = vrcp.pop %v620
      %v945 = vmul.f32 %v620, %v944
      %v946 = vsub.f32 1.0, %v945
      %v947 = vmul.f32 %v944, %v946
      %v948 = vadd.f32 %v944, %v947
      %vm949 = vweird.f32 %v620
      %vm950 = vweird.f32 %v944
      %vm951 = vmor %vm949, %vm950
      %v952 = vsel %vm951, %v944, %v948
      %v953 = vand.u32 2147483647, %v620
      %vm954 = vcmp.eq.f32.partialorder %v953, 8.507059e+37
      %v955 = vand.u32 %v620, 2147483648
      %v956 = vor.u32 1.1754944e-38, %v955
      %v957 = vsel %vm954, %v956, %v952
      %v958 = vmul.f32 1.0, %v957
      %v959 = vrcp.pop %v621
      %v960 = vmul.f32 %v621, %v959
      %v961 = vsub.f32 1.0, %v960
      %v962 = vmul.f32 %v959, %v961
      %v963 = vadd.f32 %v959, %v962
      %vm964 = vweird.f32 %v621
      %vm965 = vweird.f32 %v959
      %vm966 = vmor %vm964, %vm965
      %v967 = vsel %vm966, %v959, %v963
      %v968 = vand.u32 2147483647, %v621
      %vm969 = vcmp.eq.f32.partialorder %v968, 8.507059e+37
      %v970 = vand.u32 %v621, 2147483648
      %v971 = vor.u32 1.1754944e-38, %v970
      %v972 = vsel %vm969, %v971, %v967
      %v973 = vmul.f32 1.0, %v972
      %v974 = vrcp.pop %v622
      %v975 = vmul.f32 %v622, %v974
      %v976 = vsub.f32 1.0, %v975
      %v977 = vmul.f32 %v974, %v976
      %v978 = vadd.f32 %v974, %v977
      %vm979 = vweird.f32 %v622
      %vm980 = vweird.f32 %v974
      %vm981 = vmor %vm979, %vm980
      %v982 = vsel %vm981, %v974, %v978
      %v983 = vand.u32 2147483647, %v622
      %vm984 = vcmp.eq.f32.partialorder %v983, 8.507059e+37
      %v985 = vand.u32 %v622, 2147483648
      %v986 = vor.u32 1.1754944e-38, %v985
      %v987 = vsel %vm984, %v986, %v982
      %v988 = vmul.f32 1.0, %v987
      %v989 = vrcp.pop %v623
      %v990 = vmul.f32 %v623, %v989
      %v991 = vsub.f32 1.0, %v990
      %v992 = vmul.f32 %v989, %v991
      %v993 = vadd.f32 %v989, %v992
      %vm994 = vweird.f32 %v623
      %vm995 = vweird.f32 %v989
      %vm996 = vmor %vm994, %vm995
      %v997 = vsel %vm996, %v989, %v993
      %v998 = vand.u32 2147483647, %v623
      %vm999 = vcmp.eq.f32.partialorder %v998, 8.507059e+37
      %v1000 = vand.u32 %v623, 2147483648
      %v1001 = vor.u32 1.1754944e-38, %v1000
      %v1002 = vsel %vm999, %v1001, %v997
      %v1003 = vmul.f32 1.0, %v1002
      %v1004 = vrcp.pop %v624
      %v1005 = vmul.f32 %v624, %v1004
      %v1006 = vsub.f32 1.0, %v1005
      %v1007 = vmul.f32 %v1004, %v1006
      %v1008 = vadd.f32 %v1004, %v1007
      %vm1009 = vweird.f32 %v624
      %vm1010 = vweird.f32 %v1004
      %vm1011 = vmor %vm1009, %vm1010
      %v1012 = vsel %vm1011, %v1004, %v1008
      %v1013 = vand.u32 2147483647, %v624
      %vm1014 = vcmp.eq.f32.partialorder %v1013, 8.507059e+37
      %v1015 = vand.u32 %v624, 2147483648
      %v1016 = vor.u32 1.1754944e-38, %v1015
      %v1017 = vsel %vm1014, %v1016, %v1012
      %v1018 = vmul.f32 1.0, %v1017
      %v1019 = vrcp.pop %v625
      %v1020 = vmul.f32 %v625, %v1019
      %v1021 = vsub.f32 1.0, %v1020
      %v1022 = vmul.f32 %v1019, %v1021
      %v1023 = vadd.f32 %v1019, %v1022
      %vm1024 = vweird.f32 %v625
      %vm1025 = vweird.f32 %v1019
      %vm1026 = vmor %vm1024, %vm1025
      %v1027 = vsel %vm1026, %v1019, %v1023
      %v1028 = vand.u32 2147483647, %v625
      %vm1029 = vcmp.eq.f32.partialorder %v1028, 8.507059e+37
      %v1030 = vand.u32 %v625, 2147483648
      %v1031 = vor.u32 1.1754944e-38, %v1030
      %v1032 = vsel %vm1029, %v1031, %v1027
      %v1033 = vmul.f32 1.0, %v1032
      %v1034 = vrcp.pop %v626
      %v1035 = vmul.f32 %v626, %v1034
      %v1036 = vsub.f32 1.0, %v1035
      %v1037 = vmul.f32 %v1034, %v1036
      %v1038 = vadd.f32 %v1034, %v1037
      %vm1039 = vweird.f32 %v626
      %vm1040 = vweird.f32 %v1034
      %vm1041 = vmor %vm1039, %vm1040
      %v1042 = vsel %vm1041, %v1034, %v1038
      %v1043 = vand.u32 2147483647, %v626
      %vm1044 = vcmp.eq.f32.partialorder %v1043, 8.507059e+37
      %v1045 = vand.u32 %v626, 2147483648
      %v1046 = vor.u32 1.1754944e-38, %v1045
      %v1047 = vsel %vm1044, %v1046, %v1042
      %v1048 = vmul.f32 1.0, %v1047
      %v1049 = vrcp.pop %v627
      %v1050 = vmul.f32 %v627, %v1049
      %v1051 = vsub.f32 1.0, %v1050
      %v1052 = vmul.f32 %v1049, %v1051
      %v1053 = vadd.f32 %v1049, %v1052
      %vm1054 = vweird.f32 %v627
      %vm1055 = vweird.f32 %v1049
      %vm1056 = vmor %vm1054, %vm1055
      %v1057 = vsel %vm1056, %v1049, %v1053
      %v1058 = vand.u32 2147483647, %v627
      %vm1059 = vcmp.eq.f32.partialorder %v1058, 8.507059e+37
      %v1060 = vand.u32 %v627, 2147483648
      %v1061 = vor.u32 1.1754944e-38, %v1060
      %v1062 = vsel %vm1059, %v1061, %v1057
      %v1063 = vmul.f32 1.0, %v1062
      %v1064 = vrcp.pop %v628
      %v1065 = vmul.f32 %v628, %v1064
      %v1066 = vsub.f32 1.0, %v1065
      %v1067 = vmul.f32 %v1064, %v1066
      %v1068 = vadd.f32 %v1064, %v1067
      %vm1069 = vweird.f32 %v628
      %vm1070 = vweird.f32 %v1064
      %vm1071 = vmor %vm1069, %vm1070
      %v1072 = vsel %vm1071, %v1064, %v1068
      %v1073 = vand.u32 2147483647, %v628
      %vm1074 = vcmp.eq.f32.partialorder %v1073, 8.507059e+37
      %v1075 = vand.u32 %v628, 2147483648
      %v1076 = vor.u32 1.1754944e-38, %v1075
      %v1077 = vsel %vm1074, %v1076, %v1072
      %v1078 = vmul.f32 1.0, %v1077
      %v1079 = vrcp.pop %v629
      %v1080 = vmul.f32 %v629, %v1079
      %v1081 = vsub.f32 1.0, %v1080
      %v1082 = vmul.f32 %v1079, %v1081
      %v1083 = vadd.f32 %v1079, %v1082
      %vm1084 = vweird.f32 %v629
      %vm1085 = vweird.f32 %v1079
      %vm1086 = vmor %vm1084, %vm1085
      %v1087 = vsel %vm1086, %v1079, %v1083
      %v1088 = vand.u32 2147483647, %v629
      %vm1089 = vcmp.eq.f32.partialorder %v1088, 8.507059e+37
      %v1090 = vand.u32 %v629, 2147483648
      %v1091 = vor.u32 1.1754944e-38, %v1090
      %v1092 = vsel %vm1089, %v1091, %v1087
      %v1093 = vmul.f32 1.0, %v1092
      %v1094 = vrcp.pop %v630
      %v1095 = vmul.f32 %v630, %v1094
      %v1096 = vsub.f32 1.0, %v1095
      %v1097 = vmul.f32 %v1094, %v1096
      %v1098 = vadd.f32 %v1094, %v1097
      %vm1099 = vweird.f32 %v630
      %vm1100 = vweird.f32 %v1094
      %vm1101 = vmor %vm1099, %vm1100
      %v1102 = vsel %vm1101, %v1094, %v1098
      %v1103 = vand.u32 2147483647, %v630
      %vm1104 = vcmp.eq.f32.partialorder %v1103, 8.507059e+37
      %v1105 = vand.u32 %v630, 2147483648
      %v1106 = vor.u32 1.1754944e-38, %v1105
      %v1107 = vsel %vm1104, %v1106, %v1102
      %v1108 = vmul.f32 1.0, %v1107
      %v1109 = vrcp.pop %v631
      %v1110 = vmul.f32 %v631, %v1109
      %v1111 = vsub.f32 1.0, %v1110
      %v1112 = vmul.f32 %v1109, %v1111
      %v1113 = vadd.f32 %v1109, %v1112
      %vm1114 = vweird.f32 %v631
      %vm1115 = vweird.f32 %v1109
      %vm1116 = vmor %vm1114, %vm1115
      %v1117 = vsel %vm1116, %v1109, %v1113
      %v1118 = vand.u32 2147483647, %v631
      %vm1119 = vcmp.eq.f32.partialorder %v1118, 8.507059e+37
      %v1120 = vand.u32 %v631, 2147483648
      %v1121 = vor.u32 1.1754944e-38, %v1120
      %v1122 = vsel %vm1119, %v1121, %v1117
      %v1123 = vmul.f32 1.0, %v1122
      %v1124 = vrcp.pop %v632
      %v1125 = vmul.f32 %v632, %v1124
      %v1126 = vsub.f32 1.0, %v1125
      %v1127 = vmul.f32 %v1124, %v1126
      %v1128 = vadd.f32 %v1124, %v1127
      %vm1129 = vweird.f32 %v632
      %vm1130 = vweird.f32 %v1124
      %vm1131 = vmor %vm1129, %vm1130
      %v1132 = vsel %vm1131, %v1124, %v1128
      %v1133 = vand.u32 2147483647, %v632
      %vm1134 = vcmp.eq.f32.partialorder %v1133, 8.507059e+37
      %v1135 = vand.u32 %v632, 2147483648
      %v1136 = vor.u32 1.1754944e-38, %v1135
      %v1137 = vsel %vm1134, %v1136, %v1132
      %v1138 = vmul.f32 1.0, %v1137
      %v1139 = vrcp.pop %v633
      %v1140 = vmul.f32 %v633, %v1139
      %v1141 = vsub.f32 1.0, %v1140
      %v1142 = vmul.f32 %v1139, %v1141
      %v1143 = vadd.f32 %v1139, %v1142
      %vm1144 = vweird.f32 %v633
      %vm1145 = vweird.f32 %v1139
      %vm1146 = vmor %vm1144, %vm1145
      %v1147 = vsel %vm1146, %v1139, %v1143
      %v1148 = vand.u32 2147483647, %v633
      %vm1149 = vcmp.eq.f32.partialorder %v1148, 8.507059e+37
      %v1150 = vand.u32 %v633, 2147483648
      %v1151 = vor.u32 1.1754944e-38, %v1150
      %v1152 = vsel %vm1149, %v1151, %v1147
      %v1153 = vmul.f32 1.0, %v1152
      %v1154 = vrcp.pop %v634
      %v1155 = vmul.f32 %v634, %v1154
      %v1156 = vsub.f32 1.0, %v1155
      %v1157 = vmul.f32 %v1154, %v1156
      %v1158 = vadd.f32 %v1154, %v1157
      %vm1159 = vweird.f32 %v634
      %vm1160 = vweird.f32 %v1154
      %vm1161 = vmor %vm1159, %vm1160
      %v1162 = vsel %vm1161, %v1154, %v1158
      %v1163 = vand.u32 2147483647, %v634
      %vm1164 = vcmp.eq.f32.partialorder %v1163, 8.507059e+37
      %v1165 = vand.u32 %v634, 2147483648
      %v1166 = vor.u32 1.1754944e-38, %v1165
      %v1167 = vsel %vm1164, %v1166, %v1162
      %v1168 = vmul.f32 1.0, %v1167
      %v1169 = vrcp.pop %v635
      %v1170 = vmul.f32 %v635, %v1169
      %v1171 = vsub.f32 1.0, %v1170
      %v1172 = vmul.f32 %v1169, %v1171
      %v1173 = vadd.f32 %v1169, %v1172
      %vm1174 = vweird.f32 %v635
      %vm1175 = vweird.f32 %v1169
      %vm1176 = vmor %vm1174, %vm1175
      %v1177 = vsel %vm1176, %v1169, %v1173
      %v1178 = vand.u32 2147483647, %v635
      %vm1179 = vcmp.eq.f32.partialorder %v1178, 8.507059e+37
      %v1180 = vand.u32 %v635, 2147483648
      %v1181 = vor.u32 1.1754944e-38, %v1180
      %v1182 = vsel %vm1179, %v1181, %v1177
      %v1183 = vmul.f32 1.0, %v1182
      %v1184 = vrcp.pop %v636
      %v1185 = vmul.f32 %v636, %v1184
      %v1186 = vsub.f32 1.0, %v1185
      %v1187 = vmul.f32 %v1184, %v1186
      %v1188 = vadd.f32 %v1184, %v1187
      %vm1189 = vweird.f32 %v636
      %vm1190 = vweird.f32 %v1184
      %vm1191 = vmor %vm1189, %vm1190
      %v1192 = vsel %vm1191, %v1184, %v1188
      %v1193 = vand.u32 2147483647, %v636
      %vm1194 = vcmp.eq.f32.partialorder %v1193, 8.507059e+37
      %v1195 = vand.u32 %v636, 2147483648
      %v1196 = vor.u32 1.1754944e-38, %v1195
      %v1197 = vsel %vm1194, %v1196, %v1192
      %v1198 = vmul.f32 1.0, %v1197
      %v1199 = vrcp.pop %v637
      %v1200 = vmul.f32 %v637, %v1199
      %v1201 = vsub.f32 1.0, %v1200
      %v1202 = vmul.f32 %v1199, %v1201
      %v1203 = vadd.f32 %v1199, %v1202
      %vm1204 = vweird.f32 %v637
      %vm1205 = vweird.f32 %v1199
      %vm1206 = vmor %vm1204, %vm1205
      %v1207 = vsel %vm1206, %v1199, %v1203
      %v1208 = vand.u32 2147483647, %v637
      %vm1209 = vcmp.eq.f32.partialorder %v1208, 8.507059e+37
      %v1210 = vand.u32 %v637, 2147483648
      %v1211 = vor.u32 1.1754944e-38, %v1210
      %v1212 = vsel %vm1209, %v1211, %v1207
      %v1213 = vmul.f32 1.0, %v1212
      %v1214 = vrcp.pop %v638
      %v1215 = vmul.f32 %v638, %v1214
      %v1216 = vsub.f32 1.0, %v1215
      %v1217 = vmul.f32 %v1214, %v1216
      %v1218 = vadd.f32 %v1214, %v1217
      %vm1219 = vweird.f32 %v638
      %vm1220 = vweird.f32 %v1214
      %vm1221 = vmor %vm1219, %vm1220
      %v1222 = vsel %vm1221, %v1214, %v1218
      %v1223 = vand.u32 2147483647, %v638
      %vm1224 = vcmp.eq.f32.partialorder %v1223, 8.507059e+37
      %v1225 = vand.u32 %v638, 2147483648
      %v1226 = vor.u32 1.1754944e-38, %v1225
      %v1227 = vsel %vm1224, %v1226, %v1222
      %v1228 = vmul.f32 1.0, %v1227
      %v1229 = vrcp.pop %v639
      %v1230 = vmul.f32 %v639, %v1229
      %v1231 = vsub.f32 1.0, %v1230
      %v1232 = vmul.f32 %v1229, %v1231
      %v1233 = vadd.f32 %v1229, %v1232
      %vm1234 = vweird.f32 %v639
      %vm1235 = vweird.f32 %v1229
      %vm1236 = vmor %vm1234, %vm1235
      %v1237 = vsel %vm1236, %v1229, %v1233
      %v1238 = vand.u32 2147483647, %v639
      %vm1239 = vcmp.eq.f32.partialorder %v1238, 8.507059e+37
      %v1240 = vand.u32 %v639, 2147483648
      %v1241 = vor.u32 1.1754944e-38, %v1240
      %v1242 = vsel %vm1239, %v1241, %v1237
      %v1243 = vmul.f32 1.0, %v1242
      %v1244 = vrcp.pop %v640
      %v1245 = vmul.f32 %v640, %v1244
      %v1246 = vsub.f32 1.0, %v1245
      %v1247 = vmul.f32 %v1244, %v1246
      %v1248 = vadd.f32 %v1244, %v1247
      %vm1249 = vweird.f32 %v640
      %vm1250 = vweird.f32 %v1244
      %vm1251 = vmor %vm1249, %vm1250
      %v1252 = vsel %vm1251, %v1244, %v1248
      %v1253 = vand.u32 2147483647, %v640
      %vm1254 = vcmp.eq.f32.partialorder %v1253, 8.507059e+37
      %v1255 = vand.u32 %v640, 2147483648
      %v1256 = vor.u32 1.1754944e-38, %v1255
      %v1257 = vsel %vm1254, %v1256, %v1252
      %v1258 = vmul.f32 1.0, %v1257
      %v1259 = vrcp.pop %v641
      %v1260 = vmul.f32 %v641, %v1259
      %v1261 = vsub.f32 1.0, %v1260
      %v1262 = vmul.f32 %v1259, %v1261
      %v1263 = vadd.f32 %v1259, %v1262
      %vm1264 = vweird.f32 %v641
      %vm1265 = vweird.f32 %v1259
      %vm1266 = vmor %vm1264, %vm1265
      %v1267 = vsel %vm1266, %v1259, %v1263
      %v1268 = vand.u32 2147483647, %v641
      %vm1269 = vcmp.eq.f32.partialorder %v1268, 8.507059e+37
      %v1270 = vand.u32 %v641, 2147483648
      %v1271 = vor.u32 1.1754944e-38, %v1270
      %v1272 = vsel %vm1269, %v1271, %v1267
      %v1273 = vmul.f32 1.0, %v1272
      %v1274 = vrcp.pop %v642
      %v1275 = vmul.f32 %v642, %v1274
      %v1276 = vsub.f32 1.0, %v1275
      %v1277 = vmul.f32 %v1274, %v1276
      %v1278 = vadd.f32 %v1274, %v1277
      %vm1279 = vweird.f32 %v642
      %vm1280 = vweird.f32 %v1274
      %vm1281 = vmor %vm1279, %vm1280
      %v1282 = vsel %vm1281, %v1274, %v1278
      %v1283 = vand.u32 2147483647, %v642
      %vm1284 = vcmp.eq.f32.partialorder %v1283, 8.507059e+37
      %v1285 = vand.u32 %v642, 2147483648
      %v1286 = vor.u32 1.1754944e-38, %v1285
      %v1287 = vsel %vm1284, %v1286, %v1282
      %v1288 = vmul.f32 1.0, %v1287
      %v1289 = vrcp.pop %v643
      %v1290 = vmul.f32 %v643, %v1289
      %v1291 = vsub.f32 1.0, %v1290
      %v1292 = vmul.f32 %v1289, %v1291
      %v1293 = vadd.f32 %v1289, %v1292
      %vm1294 = vweird.f32 %v643
      %vm1295 = vweird.f32 %v1289
      %vm1296 = vmor %vm1294, %vm1295
      %v1297 = vsel %vm1296, %v1289, %v1293
      %v1298 = vand.u32 2147483647, %v643
      %vm1299 = vcmp.eq.f32.partialorder %v1298, 8.507059e+37
      %v1300 = vand.u32 %v643, 2147483648
      %v1301 = vor.u32 1.1754944e-38, %v1300
      %v1302 = vsel %vm1299, %v1301, %v1297
      %v1303 = vmul.f32 1.0, %v1302
      %v1304 = vrcp.pop %v644
      %v1305 = vmul.f32 %v644, %v1304
      %v1306 = vsub.f32 1.0, %v1305
      %v1307 = vmul.f32 %v1304, %v1306
      %v1308 = vadd.f32 %v1304, %v1307
      %vm1309 = vweird.f32 %v644
      %vm1310 = vweird.f32 %v1304
      %vm1311 = vmor %vm1309, %vm1310
      %v1312 = vsel %vm1311, %v1304, %v1308
      %v1313 = vand.u32 2147483647, %v644
      %vm1314 = vcmp.eq.f32.partialorder %v1313, 8.507059e+37
      %v1315 = vand.u32 %v644, 2147483648
      %v1316 = vor.u32 1.1754944e-38, %v1315
      %v1317 = vsel %vm1314, %v1316, %v1312
      %v1318 = vmul.f32 1.0, %v1317
      %v1319 = vrcp.pop %v645
      %v1320 = vmul.f32 %v645, %v1319
      %v1321 = vsub.f32 1.0, %v1320
      %v1322 = vmul.f32 %v1319, %v1321
      %v1323 = vadd.f32 %v1319, %v1322
      %vm1324 = vweird.f32 %v645
      %vm1325 = vweird.f32 %v1319
      %vm1326 = vmor %vm1324, %vm1325
      %v1327 = vsel %vm1326, %v1319, %v1323
      %v1328 = vand.u32 2147483647, %v645
      %vm1329 = vcmp.eq.f32.partialorder %v1328, 8.507059e+37
      %v1330 = vand.u32 %v645, 2147483648
      %v1331 = vor.u32 1.1754944e-38, %v1330
      %v1332 = vsel %vm1329, %v1331, %v1327
      %v1333 = vmul.f32 1.0, %v1332
      %v1334 = vrcp.pop %v646
      %v1335 = vmul.f32 %v646, %v1334
      %v1336 = vsub.f32 1.0, %v1335
      %v1337 = vmul.f32 %v1334, %v1336
      %v1338 = vadd.f32 %v1334, %v1337
      %vm1339 = vweird.f32 %v646
      %vm1340 = vweird.f32 %v1334
      %vm1341 = vmor %vm1339, %vm1340
      %v1342 = vsel %vm1341, %v1334, %v1338
      %v1343 = vand.u32 2147483647, %v646
      %vm1344 = vcmp.eq.f32.partialorder %v1343, 8.507059e+37
      %v1345 = vand.u32 %v646, 2147483648
      %v1346 = vor.u32 1.1754944e-38, %v1345
      %v1347 = vsel %vm1344, %v1346, %v1342
      %v1348 = vmul.f32 1.0, %v1347
      %v1349 = vrcp.pop %v647
      %v1350 = vmul.f32 %v647, %v1349
      %v1351 = vsub.f32 1.0, %v1350
      %v1352 = vmul.f32 %v1349, %v1351
      %v1353 = vadd.f32 %v1349, %v1352
      %vm1354 = vweird.f32 %v647
      %vm1355 = vweird.f32 %v1349
      %vm1356 = vmor %vm1354, %vm1355
      %v1357 = vsel %vm1356, %v1349, %v1353
      %v1358 = vand.u32 2147483647, %v647
      %vm1359 = vcmp.eq.f32.partialorder %v1358, 8.507059e+37
      %v1360 = vand.u32 %v647, 2147483648
      %v1361 = vor.u32 1.1754944e-38, %v1360
      %v1362 = vsel %vm1359, %v1361, %v1357
      %v1363 = vmul.f32 1.0, %v1362
      %v1364 = vrcp.pop %v648
      %v1365 = vmul.f32 %v648, %v1364
      %v1366 = vsub.f32 1.0, %v1365
      %v1367 = vmul.f32 %v1364, %v1366
      %v1368 = vadd.f32 %v1364, %v1367
      %vm1369 = vweird.f32 %v648
      %vm1370 = vweird.f32 %v1364
      %vm1371 = vmor %vm1369, %vm1370
      %v1372 = vsel %vm1371, %v1364, %v1368
      %v1373 = vand.u32 2147483647, %v648
      %vm1374 = vcmp.eq.f32.partialorder %v1373, 8.507059e+37
      %v1375 = vand.u32 %v648, 2147483648
      %v1376 = vor.u32 1.1754944e-38, %v1375
      %v1377 = vsel %vm1374, %v1376, %v1372
      %v1378 = vmul.f32 1.0, %v1377
      %v1379 = vrcp.pop %v649
      %v1380 = vmul.f32 %v649, %v1379
      %v1381 = vsub.f32 1.0, %v1380
      %v1382 = vmul.f32 %v1379, %v1381
      %v1383 = vadd.f32 %v1379, %v1382
      %vm1384 = vweird.f32 %v649
      %vm1385 = vweird.f32 %v1379
      %vm1386 = vmor %vm1384, %vm1385
      %v1387 = vsel %vm1386, %v1379, %v1383
      %v1388 = vand.u32 2147483647, %v649
      %vm1389 = vcmp.eq.f32.partialorder %v1388, 8.507059e+37
      %v1390 = vand.u32 %v649, 2147483648
      %v1391 = vor.u32 1.1754944e-38, %v1390
      %v1392 = vsel %vm1389, %v1391, %v1387
      %v1393 = vmul.f32 1.0, %v1392
      %v1394 = vrcp.pop %v650
      %v1395 = vmul.f32 %v650, %v1394
      %v1396 = vsub.f32 1.0, %v1395
      %v1397 = vmul.f32 %v1394, %v1396
      %v1398 = vadd.f32 %v1394, %v1397
      %vm1399 = vweird.f32 %v650
      %vm1400 = vweird.f32 %v1394
      %vm1401 = vmor %vm1399, %vm1400
      %v1402 = vsel %vm1401, %v1394, %v1398
      %v1403 = vand.u32 2147483647, %v650
      %vm1404 = vcmp.eq.f32.partialorder %v1403, 8.507059e+37
      %v1405 = vand.u32 %v650, 2147483648
      %v1406 = vor.u32 1.1754944e-38, %v1405
      %v1407 = vsel %vm1404, %v1406, %v1402
      %v1408 = vmul.f32 1.0, %v1407
      %v1409 = vrcp.pop %v651
      %v1410 = vmul.f32 %v651, %v1409
      %v1411 = vsub.f32 1.0, %v1410
      %v1412 = vmul.f32 %v1409, %v1411
      %v1413 = vadd.f32 %v1409, %v1412
      %vm1414 = vweird.f32 %v651
      %vm1415 = vweird.f32 %v1409
      %vm1416 = vmor %vm1414, %vm1415
      %v1417 = vsel %vm1416, %v1409, %v1413
      %v1418 = vand.u32 2147483647, %v651
      %vm1419 = vcmp.eq.f32.partialorder %v1418, 8.507059e+37
      %v1420 = vand.u32 %v651, 2147483648
      %v1421 = vor.u32 1.1754944e-38, %v1420
      %v1422 = vsel %vm1419, %v1421, %v1417
      %v1423 = vmul.f32 1.0, %v1422
      %v1424 = vrcp.pop %v652
      %v1425 = vmul.f32 %v652, %v1424
      %v1426 = vsub.f32 1.0, %v1425
      %v1427 = vmul.f32 %v1424, %v1426
      %v1428 = vadd.f32 %v1424, %v1427
      %vm1429 = vweird.f32 %v652
      %vm1430 = vweird.f32 %v1424
      %vm1431 = vmor %vm1429, %vm1430
      %v1432 = vsel %vm1431, %v1424, %v1428
      %v1433 = vand.u32 2147483647, %v652
      %vm1434 = vcmp.eq.f32.partialorder %v1433, 8.507059e+37
      %v1435 = vand.u32 %v652, 2147483648
      %v1436 = vor.u32 1.1754944e-38, %v1435
      %v1437 = vsel %vm1434, %v1436, %v1432
      %v1438 = vmul.f32 1.0, %v1437
      %v1439 = vrcp.pop %v653
      %v1440 = vmul.f32 %v653, %v1439
      %v1441 = vsub.f32 1.0, %v1440
      %v1442 = vmul.f32 %v1439, %v1441
      %v1443 = vadd.f32 %v1439, %v1442
      %vm1444 = vweird.f32 %v653
      %vm1445 = vweird.f32 %v1439
      %vm1446 = vmor %vm1444, %vm1445
      %v1447 = vsel %vm1446, %v1439, %v1443
      %v1448 = vand.u32 2147483647, %v653
      %vm1449 = vcmp.eq.f32.partialorder %v1448, 8.507059e+37
      %v1450 = vand.u32 %v653, 2147483648
      %v1451 = vor.u32 1.1754944e-38, %v1450
      %v1452 = vsel %vm1449, %v1451, %v1447
      %v1453 = vmul.f32 1.0, %v1452
      %v1454 = vrcp.pop %v654
      %v1455 = vmul.f32 %v654, %v1454
      %v1456 = vsub.f32 1.0, %v1455
      %v1457 = vmul.f32 %v1454, %v1456
      %v1458 = vadd.f32 %v1454, %v1457
      %vm1459 = vweird.f32 %v654
      %vm1460 = vweird.f32 %v1454
      %vm1461 = vmor %vm1459, %vm1460
      %v1462 = vsel %vm1461, %v1454, %v1458
      %v1463 = vand.u32 2147483647, %v654
      %vm1464 = vcmp.eq.f32.partialorder %v1463, 8.507059e+37
      %v1465 = vand.u32 %v654, 2147483648
      %v1466 = vor.u32 1.1754944e-38, %v1465
      %v1467 = vsel %vm1464, %v1466, %v1462
      %v1468 = vmul.f32 1.0, %v1467
      %v1469 = vrcp.pop %v655
      %v1470 = vmul.f32 %v655, %v1469
      %v1471 = vsub.f32 1.0, %v1470
      %v1472 = vmul.f32 %v1469, %v1471
      %v1473 = vadd.f32 %v1469, %v1472
      %vm1474 = vweird.f32 %v655
      %vm1475 = vweird.f32 %v1469
      %vm1476 = vmor %vm1474, %vm1475
      %v1477 = vsel %vm1476, %v1469, %v1473
      %v1478 = vand.u32 2147483647, %v655
      %vm1479 = vcmp.eq.f32.partialorder %v1478, 8.507059e+37
      %v1480 = vand.u32 %v655, 2147483648
      %v1481 = vor.u32 1.1754944e-38, %v1480
      %v1482 = vsel %vm1479, %v1481, %v1477
      %v1483 = vmul.f32 1.0, %v1482
      %v1484 = vrcp.pop %v656
      %v1485 = vmul.f32 %v656, %v1484
      %v1486 = vsub.f32 1.0, %v1485
      %v1487 = vmul.f32 %v1484, %v1486
      %v1488 = vadd.f32 %v1484, %v1487
      %vm1489 = vweird.f32 %v656
      %vm1490 = vweird.f32 %v1484
      %vm1491 = vmor %vm1489, %vm1490
      %v1492 = vsel %vm1491, %v1484, %v1488
      %v1493 = vand.u32 2147483647, %v656
      %vm1494 = vcmp.eq.f32.partialorder %v1493, 8.507059e+37
      %v1495 = vand.u32 %v656, 2147483648
      %v1496 = vor.u32 1.1754944e-38, %v1495
      %v1497 = vsel %vm1494, %v1496, %v1492
      %v1498 = vmul.f32 1.0, %v1497
      %v1499 = vrcp.pop %v657
      %v1500 = vmul.f32 %v657, %v1499
      %v1501 = vsub.f32 1.0, %v1500
      %v1502 = vmul.f32 %v1499, %v1501
      %v1503 = vadd.f32 %v1499, %v1502
      %vm1504 = vweird.f32 %v657
      %vm1505 = vweird.f32 %v1499
      %vm1506 = vmor %vm1504, %vm1505
      %v1507 = vsel %vm1506, %v1499, %v1503
      %v1508 = vand.u32 2147483647, %v657
      %vm1509 = vcmp.eq.f32.partialorder %v1508, 8.507059e+37
      %v1510 = vand.u32 %v657, 2147483648
      %v1511 = vor.u32 1.1754944e-38, %v1510
      %v1512 = vsel %vm1509, %v1511, %v1507
      %v1513 = vmul.f32 1.0, %v1512
      %v1514 = vrcp.pop %v658
      %v1515 = vmul.f32 %v658, %v1514
      %v1516 = vsub.f32 1.0, %v1515
      %v1517 = vmul.f32 %v1514, %v1516
      %v1518 = vadd.f32 %v1514, %v1517
      %vm1519 = vweird.f32 %v658
      %vm1520 = vweird.f32 %v1514
      %vm1521 = vmor %vm1519, %vm1520
      %v1522 = vsel %vm1521, %v1514, %v1518
      %v1523 = vand.u32 2147483647, %v658
      %vm1524 = vcmp.eq.f32.partialorder %v1523, 8.507059e+37
      %v1525 = vand.u32 %v658, 2147483648
      %v1526 = vor.u32 1.1754944e-38, %v1525
      %v1527 = vsel %vm1524, %v1526, %v1522
      %v1528 = vmul.f32 1.0, %v1527
      %v1529 = vrcp.pop %v659
      %v1530 = vmul.f32 %v659, %v1529
      %v1531 = vsub.f32 1.0, %v1530
      %v1532 = vmul.f32 %v1529, %v1531
      %v1533 = vadd.f32 %v1529, %v1532
      %vm1534 = vweird.f32 %v659
      %vm1535 = vweird.f32 %v1529
      %vm1536 = vmor %vm1534, %vm1535
      %v1537 = vsel %vm1536, %v1529, %v1533
      %v1538 = vand.u32 2147483647, %v659
      %vm1539 = vcmp.eq.f32.partialorder %v1538, 8.507059e+37
      %v1540 = vand.u32 %v659, 2147483648
      %v1541 = vor.u32 1.1754944e-38, %v1540
      %v1542 = vsel %vm1539, %v1541, %v1537
      %v1543 = vmul.f32 1.0, %v1542
      %v1544 = vrcp.pop %v660
      %v1545 = vmul.f32 %v660, %v1544
      %v1546 = vsub.f32 1.0, %v1545
      %v1547 = vmul.f32 %v1544, %v1546
      %v1548 = vadd.f32 %v1544, %v1547
      %vm1549 = vweird.f32 %v660
      %vm1550 = vweird.f32 %v1544
      %vm1551 = vmor %vm1549, %vm1550
      %v1552 = vsel %vm1551, %v1544, %v1548
      %v1553 = vand.u32 2147483647, %v660
      %vm1554 = vcmp.eq.f32.partialorder %v1553, 8.507059e+37
      %v1555 = vand.u32 %v660, 2147483648
      %v1556 = vor.u32 1.1754944e-38, %v1555
      %v1557 = vsel %vm1554, %v1556, %v1552
      %v1558 = vmul.f32 1.0, %v1557
      %v1559 = vrcp.pop %v661
      %v1560 = vmul.f32 %v661, %v1559
      %v1561 = vsub.f32 1.0, %v1560
      %v1562 = vmul.f32 %v1559, %v1561
      %v1563 = vadd.f32 %v1559, %v1562
      %vm1564 = vweird.f32 %v661
      %vm1565 = vweird.f32 %v1559
      %vm1566 = vmor %vm1564, %vm1565
      %v1567 = vsel %vm1566, %v1559, %v1563
      %v1568 = vand.u32 2147483647, %v661
      %vm1569 = vcmp.eq.f32.partialorder %v1568, 8.507059e+37
      %v1570 = vand.u32 %v661, 2147483648
      %v1571 = vor.u32 1.1754944e-38, %v1570
      %v1572 = vsel %vm1569, %v1571, %v1567
      %v1573 = vmul.f32 1.0, %v1572
      %v1574 = vrcp.pop %v662
      %v1575 = vmul.f32 %v662, %v1574
      %v1576 = vsub.f32 1.0, %v1575
      %v1577 = vmul.f32 %v1574, %v1576
      %v1578 = vadd.f32 %v1574, %v1577
      %vm1579 = vweird.f32 %v662
      %vm1580 = vweird.f32 %v1574
      %vm1581 = vmor %vm1579, %vm1580
      %v1582 = vsel %vm1581, %v1574, %v1578
      %v1583 = vand.u32 2147483647, %v662
      %vm1584 = vcmp.eq.f32.partialorder %v1583, 8.507059e+37
      %v1585 = vand.u32 %v662, 2147483648
      %v1586 = vor.u32 1.1754944e-38, %v1585
      %v1587 = vsel %vm1584, %v1586, %v1582
      %v1588 = vmul.f32 1.0, %v1587
      %v1589 = vrcp.pop %v663
      %v1590 = vmul.f32 %v663, %v1589
      %v1591 = vsub.f32 1.0, %v1590
      %v1592 = vmul.f32 %v1589, %v1591
      %v1593 = vadd.f32 %v1589, %v1592
      %vm1594 = vweird.f32 %v663
      %vm1595 = vweird.f32 %v1589
      %vm1596 = vmor %vm1594, %vm1595
      %v1597 = vsel %vm1596, %v1589, %v1593
      %v1598 = vand.u32 2147483647, %v663
      %vm1599 = vcmp.eq.f32.partialorder %v1598, 8.507059e+37
      %v1600 = vand.u32 %v663, 2147483648
      %v1601 = vor.u32 1.1754944e-38, %v1600
      %v1602 = vsel %vm1599, %v1601, %v1597
      %v1603 = vmul.f32 1.0, %v1602
      %v1604 = vrcp.pop %v664
      %v1605 = vmul.f32 %v664, %v1604
      %v1606 = vsub.f32 1.0, %v1605
      %v1607 = vmul.f32 %v1604, %v1606
      %v1608 = vadd.f32 %v1604, %v1607
      %vm1609 = vweird.f32 %v664
      %vm1610 = vweird.f32 %v1604
      %vm1611 = vmor %vm1609, %vm1610
      %v1612 = vsel %vm1611, %v1604, %v1608
      %v1613 = vand.u32 2147483647, %v664
      %vm1614 = vcmp.eq.f32.partialorder %v1613, 8.507059e+37
      %v1615 = vand.u32 %v664, 2147483648
      %v1616 = vor.u32 1.1754944e-38, %v1615
      %v1617 = vsel %vm1614, %v1616, %v1612
      %v1618 = vmul.f32 1.0, %v1617
      %v1619 = vrcp.pop %v665
      %v1620 = vmul.f32 %v665, %v1619
      %v1621 = vsub.f32 1.0, %v1620
      %v1622 = vmul.f32 %v1619, %v1621
      %v1623 = vadd.f32 %v1619, %v1622
      %vm1624 = vweird.f32 %v665
      %vm1625 = vweird.f32 %v1619
      %vm1626 = vmor %vm1624, %vm1625
      %v1627 = vsel %vm1626, %v1619, %v1623
      %v1628 = vand.u32 2147483647, %v665
      %vm1629 = vcmp.eq.f32.partialorder %v1628, 8.507059e+37
      %v1630 = vand.u32 %v665, 2147483648
      %v1631 = vor.u32 1.1754944e-38, %v1630
      %v1632 = vsel %vm1629, %v1631, %v1627
      %v1633 = vmul.f32 1.0, %v1632
      %v1634 = vrcp.pop %v666
      %v1635 = vmul.f32 %v666, %v1634
      %v1636 = vsub.f32 1.0, %v1635
      %v1637 = vmul.f32 %v1634, %v1636
      %v1638 = vadd.f32 %v1634, %v1637
      %vm1639 = vweird.f32 %v666
      %vm1640 = vweird.f32 %v1634
      %vm1641 = vmor %vm1639, %vm1640
      %v1642 = vsel %vm1641, %v1634, %v1638
      %v1643 = vand.u32 2147483647, %v666
      %vm1644 = vcmp.eq.f32.partialorder %v1643, 8.507059e+37
      %v1645 = vand.u32 %v666, 2147483648
      %v1646 = vor.u32 1.1754944e-38, %v1645
      %v1647 = vsel %vm1644, %v1646, %v1642
      %v1648 = vmul.f32 1.0, %v1647
      %v1649 = vrcp.pop %v667
      %v1650 = vmul.f32 %v667, %v1649
      %v1651 = vsub.f32 1.0, %v1650
      %v1652 = vmul.f32 %v1649, %v1651
      %v1653 = vadd.f32 %v1649, %v1652
      %vm1654 = vweird.f32 %v667
      %vm1655 = vweird.f32 %v1649
      %vm1656 = vmor %vm1654, %vm1655
      %v1657 = vsel %vm1656, %v1649, %v1653
      %v1658 = vand.u32 2147483647, %v667
      %vm1659 = vcmp.eq.f32.partialorder %v1658, 8.507059e+37
      %v1660 = vand.u32 %v667, 2147483648
      %v1661 = vor.u32 1.1754944e-38, %v1660
      %v1662 = vsel %vm1659, %v1661, %v1657
      %v1663 = vmul.f32 1.0, %v1662
      %v1664 = vrcp.pop %v668
      %v1665 = vmul.f32 %v668, %v1664
      %v1666 = vsub.f32 1.0, %v1665
      %v1667 = vmul.f32 %v1664, %v1666
      %v1668 = vadd.f32 %v1664, %v1667
      %vm1669 = vweird.f32 %v668
      %vm1670 = vweird.f32 %v1664
      %vm1671 = vmor %vm1669, %vm1670
      %v1672 = vsel %vm1671, %v1664, %v1668
      %v1673 = vand.u32 2147483647, %v668
      %vm1674 = vcmp.eq.f32.partialorder %v1673, 8.507059e+37
      %v1675 = vand.u32 %v668, 2147483648
      %v1676 = vor.u32 1.1754944e-38, %v1675
      %v1677 = vsel %vm1674, %v1676, %v1672
      %v1678 = vmul.f32 1.0, %v1677
      %v1679 = vrcp.pop %v669
      %v1680 = vmul.f32 %v669, %v1679
      %v1681 = vsub.f32 1.0, %v1680
      %v1682 = vmul.f32 %v1679, %v1681
      %v1683 = vadd.f32 %v1679, %v1682
      %vm1684 = vweird.f32 %v669
      %vm1685 = vweird.f32 %v1679
      %vm1686 = vmor %vm1684, %vm1685
      %v1687 = vsel %vm1686, %v1679, %v1683
      %v1688 = vand.u32 2147483647, %v669
      %vm1689 = vcmp.eq.f32.partialorder %v1688, 8.507059e+37
      %v1690 = vand.u32 %v669, 2147483648
      %v1691 = vor.u32 1.1754944e-38, %v1690
      %v1692 = vsel %vm1689, %v1691, %v1687
      %v1693 = vmul.f32 1.0, %v1692
      %v1694 = vrcp.pop %v670
      %v1695 = vmul.f32 %v670, %v1694
      %v1696 = vsub.f32 1.0, %v1695
      %v1697 = vmul.f32 %v1694, %v1696
      %v1698 = vadd.f32 %v1694, %v1697
      %vm1699 = vweird.f32 %v670
      %vm1700 = vweird.f32 %v1694
      %vm1701 = vmor %vm1699, %vm1700
      %v1702 = vsel %vm1701, %v1694, %v1698
      %v1703 = vand.u32 2147483647, %v670
      %vm1704 = vcmp.eq.f32.partialorder %v1703, 8.507059e+37
      %v1705 = vand.u32 %v670, 2147483648
      %v1706 = vor.u32 1.1754944e-38, %v1705
      %v1707 = vsel %vm1704, %v1706, %v1702
      %v1708 = vmul.f32 1.0, %v1707
      %v1709 = vrcp.pop %v671
      %v1710 = vmul.f32 %v671, %v1709
      %v1711 = vsub.f32 1.0, %v1710
      %v1712 = vmul.f32 %v1709, %v1711
      %v1713 = vadd.f32 %v1709, %v1712
      %vm1714 = vweird.f32 %v671
      %vm1715 = vweird.f32 %v1709
      %vm1716 = vmor %vm1714, %vm1715
      %v1717 = vsel %vm1716, %v1709, %v1713
      %v1718 = vand.u32 2147483647, %v671
      %vm1719 = vcmp.eq.f32.partialorder %v1718, 8.507059e+37
      %v1720 = vand.u32 %v671, 2147483648
      %v1721 = vor.u32 1.1754944e-38, %v1720
      %v1722 = vsel %vm1719, %v1721, %v1717
      %v1723 = vmul.f32 1.0, %v1722
      %v1724 = vrcp.pop %v672
      %v1725 = vmul.f32 %v672, %v1724
      %v1726 = vsub.f32 1.0, %v1725
      %v1727 = vmul.f32 %v1724, %v1726
      %v1728 = vadd.f32 %v1724, %v1727
      %vm1729 = vweird.f32 %v672
      %vm1730 = vweird.f32 %v1724
      %vm1731 = vmor %vm1729, %vm1730
      %v1732 = vsel %vm1731, %v1724, %v1728
      %v1733 = vand.u32 2147483647, %v672
      %vm1734 = vcmp.eq.f32.partialorder %v1733, 8.507059e+37
      %v1735 = vand.u32 %v672, 2147483648
      %v1736 = vor.u32 1.1754944e-38, %v1735
      %v1737 = vsel %vm1734, %v1736, %v1732
      %v1738 = vmul.f32 1.0, %v1737
      %v1739 = vrcp.pop %v673
      %v1740 = vmul.f32 %v673, %v1739
      %v1741 = vsub.f32 1.0, %v1740
      %v1742 = vmul.f32 %v1739, %v1741
      %v1743 = vadd.f32 %v1739, %v1742
      %vm1744 = vweird.f32 %v673
      %vm1745 = vweird.f32 %v1739
      %vm1746 = vmor %vm1744, %vm1745
      %v1747 = vsel %vm1746, %v1739, %v1743
      %v1748 = vand.u32 2147483647, %v673
      %vm1749 = vcmp.eq.f32.partialorder %v1748, 8.507059e+37
      %v1750 = vand.u32 %v673, 2147483648
      %v1751 = vor.u32 1.1754944e-38, %v1750
      %v1752 = vsel %vm1749, %v1751, %v1747
      %v1753 = vmul.f32 1.0, %v1752
      %v1754 = vrcp.pop %v674
      %v1755 = vmul.f32 %v674, %v1754
      %v1756 = vsub.f32 1.0, %v1755
      %v1757 = vmul.f32 %v1754, %v1756
      %v1758 = vadd.f32 %v1754, %v1757
      %vm1759 = vweird.f32 %v674
      %vm1760 = vweird.f32 %v1754
      %vm1761 = vmor %vm1759, %vm1760
      %v1762 = vsel %vm1761, %v1754, %v1758
      %v1763 = vand.u32 2147483647, %v674
      %vm1764 = vcmp.eq.f32.partialorder %v1763, 8.507059e+37
      %v1765 = vand.u32 %v674, 2147483648
      %v1766 = vor.u32 1.1754944e-38, %v1765
      %v1767 = vsel %vm1764, %v1766, %v1762
      %v1768 = vmul.f32 1.0, %v1767
      %v1769 = vrcp.pop %v675
      %v1770 = vmul.f32 %v675, %v1769
      %v1771 = vsub.f32 1.0, %v1770
      %v1772 = vmul.f32 %v1769, %v1771
      %v1773 = vadd.f32 %v1769, %v1772
      %vm1774 = vweird.f32 %v675
      %vm1775 = vweird.f32 %v1769
      %vm1776 = vmor %vm1774, %vm1775
      %v1777 = vsel %vm1776, %v1769, %v1773
      %v1778 = vand.u32 2147483647, %v675
      %vm1779 = vcmp.eq.f32.partialorder %v1778, 8.507059e+37
      %v1780 = vand.u32 %v675, 2147483648
      %v1781 = vor.u32 1.1754944e-38, %v1780
      %v1782 = vsel %vm1779, %v1781, %v1777
      %v1783 = vmul.f32 1.0, %v1782
      %v1784 = vrcp.pop %v676
      %v1785 = vmul.f32 %v676, %v1784
      %v1786 = vsub.f32 1.0, %v1785
      %v1787 = vmul.f32 %v1784, %v1786
      %v1788 = vadd.f32 %v1784, %v1787
      %vm1789 = vweird.f32 %v676
      %vm1790 = vweird.f32 %v1784
      %vm1791 = vmor %vm1789, %vm1790
      %v1792 = vsel %vm1791, %v1784, %v1788
      %v1793 = vand.u32 2147483647, %v676
      %vm1794 = vcmp.eq.f32.partialorder %v1793, 8.507059e+37
      %v1795 = vand.u32 %v676, 2147483648
      %v1796 = vor.u32 1.1754944e-38, %v1795
      %v1797 = vsel %vm1794, %v1796, %v1792
      %v1798 = vmul.f32 1.0, %v1797
      %v1799 = vrcp.pop %v677
      %v1800 = vmul.f32 %v677, %v1799
      %v1801 = vsub.f32 1.0, %v1800
      %v1802 = vmul.f32 %v1799, %v1801
      %v1803 = vadd.f32 %v1799, %v1802
      %vm1804 = vweird.f32 %v677
      %vm1805 = vweird.f32 %v1799
      %vm1806 = vmor %vm1804, %vm1805
      %v1807 = vsel %vm1806, %v1799, %v1803
      %v1808 = vand.u32 2147483647, %v677
      %vm1809 = vcmp.eq.f32.partialorder %v1808, 8.507059e+37
      %v1810 = vand.u32 %v677, 2147483648
      %v1811 = vor.u32 1.1754944e-38, %v1810
      %v1812 = vsel %vm1809, %v1811, %v1807
      %v1813 = vmul.f32 1.0, %v1812
      %v1814 = vrcp.pop %v678
      %v1815 = vmul.f32 %v678, %v1814
      %v1816 = vsub.f32 1.0, %v1815
      %v1817 = vmul.f32 %v1814, %v1816
      %v1818 = vadd.f32 %v1814, %v1817
      %vm1819 = vweird.f32 %v678
      %vm1820 = vweird.f32 %v1814
      %vm1821 = vmor %vm1819, %vm1820
      %v1822 = vsel %vm1821, %v1814, %v1818
      %v1823 = vand.u32 2147483647, %v678
      %vm1824 = vcmp.eq.f32.partialorder %v1823, 8.507059e+37
      %v1825 = vand.u32 %v678, 2147483648
      %v1826 = vor.u32 1.1754944e-38, %v1825
      %v1827 = vsel %vm1824, %v1826, %v1822
      %v1828 = vmul.f32 1.0, %v1827
      %v1829 = vrcp.pop %v679
      %v1830 = vmul.f32 %v679, %v1829
      %v1831 = vsub.f32 1.0, %v1830
      %v1832 = vmul.f32 %v1829, %v1831
      %v1833 = vadd.f32 %v1829, %v1832
      %vm1834 = vweird.f32 %v679
      %vm1835 = vweird.f32 %v1829
      %vm1836 = vmor %vm1834, %vm1835
      %v1837 = vsel %vm1836, %v1829, %v1833
      %v1838 = vand.u32 2147483647, %v679
      %vm1839 = vcmp.eq.f32.partialorder %v1838, 8.507059e+37
      %v1840 = vand.u32 %v679, 2147483648
      %v1841 = vor.u32 1.1754944e-38, %v1840
      %v1842 = vsel %vm1839, %v1841, %v1837
      %v1843 = vmul.f32 1.0, %v1842
      %v1844 = vrcp.pop %v680
      %v1845 = vmul.f32 %v680, %v1844
      %v1846 = vsub.f32 1.0, %v1845
      %v1847 = vmul.f32 %v1844, %v1846
      %v1848 = vadd.f32 %v1844, %v1847
      %vm1849 = vweird.f32 %v680
      %vm1850 = vweird.f32 %v1844
      %vm1851 = vmor %vm1849, %vm1850
      %v1852 = vsel %vm1851, %v1844, %v1848
      %v1853 = vand.u32 2147483647, %v680
      %vm1854 = vcmp.eq.f32.partialorder %v1853, 8.507059e+37
      %v1855 = vand.u32 %v680, 2147483648
      %v1856 = vor.u32 1.1754944e-38, %v1855
      %v1857 = vsel %vm1854, %v1856, %v1852
      %v1858 = vmul.f32 1.0, %v1857
      %v1859 = vrcp.pop %v681
      %v1860 = vmul.f32 %v681, %v1859
      %v1861 = vsub.f32 1.0, %v1860
      %v1862 = vmul.f32 %v1859, %v1861
      %v1863 = vadd.f32 %v1859, %v1862
      %vm1864 = vweird.f32 %v681
      %vm1865 = vweird.f32 %v1859
      %vm1866 = vmor %vm1864, %vm1865
      %v1867 = vsel %vm1866, %v1859, %v1863
      %v1868 = vand.u32 2147483647, %v681
      %vm1869 = vcmp.eq.f32.partialorder %v1868, 8.507059e+37
      %v1870 = vand.u32 %v681, 2147483648
      %v1871 = vor.u32 1.1754944e-38, %v1870
      %v1872 = vsel %vm1869, %v1871, %v1867
      %v1873 = vmul.f32 1.0, %v1872
      %v1874 = vrcp.pop %v682
      %v1875 = vmul.f32 %v682, %v1874
      %v1876 = vsub.f32 1.0, %v1875
      %v1877 = vmul.f32 %v1874, %v1876
      %v1878 = vadd.f32 %v1874, %v1877
      %vm1879 = vweird.f32 %v682
      %vm1880 = vweird.f32 %v1874
      %vm1881 = vmor %vm1879, %vm1880
      %v1882 = vsel %vm1881, %v1874, %v1878
      %v1883 = vand.u32 2147483647, %v682
      %vm1884 = vcmp.eq.f32.partialorder %v1883, 8.507059e+37
      %v1885 = vand.u32 %v682, 2147483648
      %v1886 = vor.u32 1.1754944e-38, %v1885
      %v1887 = vsel %vm1884, %v1886, %v1882
      %v1888 = vmul.f32 1.0, %v1887
      %v1889 = vrcp.pop %v683
      %v1890 = vmul.f32 %v683, %v1889
      %v1891 = vsub.f32 1.0, %v1890
      %v1892 = vmul.f32 %v1889, %v1891
      %v1893 = vadd.f32 %v1889, %v1892
      %vm1894 = vweird.f32 %v683
      %vm1895 = vweird.f32 %v1889
      %vm1896 = vmor %vm1894, %vm1895
      %v1897 = vsel %vm1896, %v1889, %v1893
      %v1898 = vand.u32 2147483647, %v683
      %vm1899 = vcmp.eq.f32.partialorder %v1898, 8.507059e+37
      %v1900 = vand.u32 %v683, 2147483648
      %v1901 = vor.u32 1.1754944e-38, %v1900
      %v1902 = vsel %vm1899, %v1901, %v1897
      %v1903 = vmul.f32 1.0, %v1902
      %v1904 = vrcp.pop %v684
      %v1905 = vmul.f32 %v684, %v1904
      %v1906 = vsub.f32 1.0, %v1905
      %v1907 = vmul.f32 %v1904, %v1906
      %v1908 = vadd.f32 %v1904, %v1907
      %vm1909 = vweird.f32 %v684
      %vm1910 = vweird.f32 %v1904
      %vm1911 = vmor %vm1909, %vm1910
      %v1912 = vsel %vm1911, %v1904, %v1908
      %v1913 = vand.u32 2147483647, %v684
      %vm1914 = vcmp.eq.f32.partialorder %v1913, 8.507059e+37
      %v1915 = vand.u32 %v684, 2147483648
      %v1916 = vor.u32 1.1754944e-38, %v1915
      %v1917 = vsel %vm1914, %v1916, %v1912
      %v1918 = vmul.f32 1.0, %v1917
      %v1919 = vrcp.pop %v685
      %v1920 = vmul.f32 %v685, %v1919
      %v1921 = vsub.f32 1.0, %v1920
      %v1922 = vmul.f32 %v1919, %v1921
      %v1923 = vadd.f32 %v1919, %v1922
      %vm1924 = vweird.f32 %v685
      %vm1925 = vweird.f32 %v1919
      %vm1926 = vmor %vm1924, %vm1925
      %v1927 = vsel %vm1926, %v1919, %v1923
      %v1928 = vand.u32 2147483647, %v685
      %vm1929 = vcmp.eq.f32.partialorder %v1928, 8.507059e+37
      %v1930 = vand.u32 %v685, 2147483648
      %v1931 = vor.u32 1.1754944e-38, %v1930
      %v1932 = vsel %vm1929, %v1931, %v1927
      %v1933 = vmul.f32 1.0, %v1932
      %v1934 = vrcp.pop %v686
      %v1935 = vmul.f32 %v686, %v1934
      %v1936 = vsub.f32 1.0, %v1935
      %v1937 = vmul.f32 %v1934, %v1936
      %v1938 = vadd.f32 %v1934, %v1937
      %vm1939 = vweird.f32 %v686
      %vm1940 = vweird.f32 %v1934
      %vm1941 = vmor %vm1939, %vm1940
      %v1942 = vsel %vm1941, %v1934, %v1938
      %v1943 = vand.u32 2147483647, %v686
      %vm1944 = vcmp.eq.f32.partialorder %v1943, 8.507059e+37
      %v1945 = vand.u32 %v686, 2147483648
      %v1946 = vor.u32 1.1754944e-38, %v1945
      %v1947 = vsel %vm1944, %v1946, %v1942
      %v1948 = vmul.f32 1.0, %v1947
      %v1949 = vrcp.pop %v687
      %v1950 = vmul.f32 %v687, %v1949
      %v1951 = vsub.f32 1.0, %v1950
      %v1952 = vmul.f32 %v1949, %v1951
      %v1953 = vadd.f32 %v1949, %v1952
      %vm1954 = vweird.f32 %v687
      %vm1955 = vweird.f32 %v1949
      %vm1956 = vmor %vm1954, %vm1955
      %v1957 = vsel %vm1956, %v1949, %v1953
      %v1958 = vand.u32 2147483647, %v687
      %vm1959 = vcmp.eq.f32.partialorder %v1958, 8.507059e+37
      %v1960 = vand.u32 %v687, 2147483648
      %v1961 = vor.u32 1.1754944e-38, %v1960
      %v1962 = vsel %vm1959, %v1961, %v1957
      %v1963 = vmul.f32 1.0, %v1962
      %v1964 = vrcp.pop %v688
      %v1965 = vmul.f32 %v688, %v1964
      %v1966 = vsub.f32 1.0, %v1965
      %v1967 = vmul.f32 %v1964, %v1966
      %v1968 = vadd.f32 %v1964, %v1967
      %vm1969 = vweird.f32 %v688
      %vm1970 = vweird.f32 %v1964
      %vm1971 = vmor %vm1969, %vm1970
      %v1972 = vsel %vm1971, %v1964, %v1968
      %v1973 = vand.u32 2147483647, %v688
      %vm1974 = vcmp.eq.f32.partialorder %v1973, 8.507059e+37
      %v1975 = vand.u32 %v688, 2147483648
      %v1976 = vor.u32 1.1754944e-38, %v1975
      %v1977 = vsel %vm1974, %v1976, %v1972
      %v1978 = vmul.f32 1.0, %v1977
      %v1979 = vrcp.pop %v689
      %v1980 = vmul.f32 %v689, %v1979
      %v1981 = vsub.f32 1.0, %v1980
      %v1982 = vmul.f32 %v1979, %v1981
      %v1983 = vadd.f32 %v1979, %v1982
      %vm1984 = vweird.f32 %v689
      %vm1985 = vweird.f32 %v1979
      %vm1986 = vmor %vm1984, %vm1985
      %v1987 = vsel %vm1986, %v1979, %v1983
      %v1988 = vand.u32 2147483647, %v689
      %vm1989 = vcmp.eq.f32.partialorder %v1988, 8.507059e+37
      %v1990 = vand.u32 %v689, 2147483648
      %v1991 = vor.u32 1.1754944e-38, %v1990
      %v1992 = vsel %vm1989, %v1991, %v1987
      %v1993 = vmul.f32 1.0, %v1992
      %v1994 = vrcp.pop %v690
      %v1995 = vmul.f32 %v690, %v1994
      %v1996 = vsub.f32 1.0, %v1995
      %v1997 = vmul.f32 %v1994, %v1996
      %v1998 = vadd.f32 %v1994, %v1997
      %vm1999 = vweird.f32 %v690
      %vm2000 = vweird.f32 %v1994
      %vm2001 = vmor %vm1999, %vm2000
      %v2002 = vsel %vm2001, %v1994, %v1998
      %v2003 = vand.u32 2147483647, %v690
      %vm2004 = vcmp.eq.f32.partialorder %v2003, 8.507059e+37
      %v2005 = vand.u32 %v690, 2147483648
      %v2006 = vor.u32 1.1754944e-38, %v2005
      %v2007 = vsel %vm2004, %v2006, %v2002
      %v2008 = vmul.f32 1.0, %v2007
      %v2009 = vrcp.pop %v691
      %v2010 = vmul.f32 %v691, %v2009
      %v2011 = vsub.f32 1.0, %v2010
      %v2012 = vmul.f32 %v2009, %v2011
      %v2013 = vadd.f32 %v2009, %v2012
      %vm2014 = vweird.f32 %v691
      %vm2015 = vweird.f32 %v2009
      %vm2016 = vmor %vm2014, %vm2015
      %v2017 = vsel %vm2016, %v2009, %v2013
      %v2018 = vand.u32 2147483647, %v691
      %vm2019 = vcmp.eq.f32.partialorder %v2018, 8.507059e+37
      %v2020 = vand.u32 %v691, 2147483648
      %v2021 = vor.u32 1.1754944e-38, %v2020
      %v2022 = vsel %vm2019, %v2021, %v2017
      %v2023 = vmul.f32 1.0, %v2022
      %v2024 = vrcp.pop %v692
      %v2025 = vmul.f32 %v692, %v2024
      %v2026 = vsub.f32 1.0, %v2025
      %v2027 = vmul.f32 %v2024, %v2026
      %v2028 = vadd.f32 %v2024, %v2027
      %vm2029 = vweird.f32 %v692
      %vm2030 = vweird.f32 %v2024
      %vm2031 = vmor %vm2029, %vm2030
      %v2032 = vsel %vm2031, %v2024, %v2028
      %v2033 = vand.u32 2147483647, %v692
      %vm2034 = vcmp.eq.f32.partialorder %v2033, 8.507059e+37
      %v2035 = vand.u32 %v692, 2147483648
      %v2036 = vor.u32 1.1754944e-38, %v2035
      %v2037 = vsel %vm2034, %v2036, %v2032
      %v2038 = vmul.f32 1.0, %v2037
      %v2039 = vrcp.pop %v693
      %v2040 = vmul.f32 %v693, %v2039
      %v2041 = vsub.f32 1.0, %v2040
      %v2042 = vmul.f32 %v2039, %v2041
      %v2043 = vadd.f32 %v2039, %v2042
      %vm2044 = vweird.f32 %v693
      %vm2045 = vweird.f32 %v2039
      %vm2046 = vmor %vm2044, %vm2045
      %v2047 = vsel %vm2046, %v2039, %v2043
      %v2048 = vand.u32 2147483647, %v693
      %vm2049 = vcmp.eq.f32.partialorder %v2048, 8.507059e+37
      %v2050 = vand.u32 %v693, 2147483648
      %v2051 = vor.u32 1.1754944e-38, %v2050
      %v2052 = vsel %vm2049, %v2051, %v2047
      %v2053 = vmul.f32 1.0, %v2052
      %v2054 = vrcp.pop %v694
      %v2055 = vmul.f32 %v694, %v2054
      %v2056 = vsub.f32 1.0, %v2055
      %v2057 = vmul.f32 %v2054, %v2056
      %v2058 = vadd.f32 %v2054, %v2057
      %vm2059 = vweird.f32 %v694
      %vm2060 = vweird.f32 %v2054
      %vm2061 = vmor %vm2059, %vm2060
      %v2062 = vsel %vm2061, %v2054, %v2058
      %v2063 = vand.u32 2147483647, %v694
      %vm2064 = vcmp.eq.f32.partialorder %v2063, 8.507059e+37
      %v2065 = vand.u32 %v694, 2147483648
      %v2066 = vor.u32 1.1754944e-38, %v2065
      %v2067 = vsel %vm2064, %v2066, %v2062
      %v2068 = vmul.f32 1.0, %v2067
      %v2069 = vrcp.pop %v695
      %v2070 = vmul.f32 %v695, %v2069
      %v2071 = vsub.f32 1.0, %v2070
      %v2072 = vmul.f32 %v2069, %v2071
      %v2073 = vadd.f32 %v2069, %v2072
      %vm2074 = vweird.f32 %v695
      %vm2075 = vweird.f32 %v2069
      %vm2076 = vmor %vm2074, %vm2075
      %v2077 = vsel %vm2076, %v2069, %v2073
      %v2078 = vand.u32 2147483647, %v695
      %vm2079 = vcmp.eq.f32.partialorder %v2078, 8.507059e+37
      %v2080 = vand.u32 %v695, 2147483648
      %v2081 = vor.u32 1.1754944e-38, %v2080
      %v2082 = vsel %vm2079, %v2081, %v2077
      %v2083 = vmul.f32 1.0, %v2082
      %v2084 = vrcp.pop %v696
      %v2085 = vmul.f32 %v696, %v2084
      %v2086 = vsub.f32 1.0, %v2085
      %v2087 = vmul.f32 %v2084, %v2086
      %v2088 = vadd.f32 %v2084, %v2087
      %vm2089 = vweird.f32 %v696
      %vm2090 = vweird.f32 %v2084
      %vm2091 = vmor %vm2089, %vm2090
      %v2092 = vsel %vm2091, %v2084, %v2088
      %v2093 = vand.u32 2147483647, %v696
      %vm2094 = vcmp.eq.f32.partialorder %v2093, 8.507059e+37
      %v2095 = vand.u32 %v696, 2147483648
      %v2096 = vor.u32 1.1754944e-38, %v2095
      %v2097 = vsel %vm2094, %v2096, %v2092
      %v2098 = vmul.f32 1.0, %v2097
      %v2099 = vrcp.pop %v697
      %v2100 = vmul.f32 %v697, %v2099
      %v2101 = vsub.f32 1.0, %v2100
      %v2102 = vmul.f32 %v2099, %v2101
      %v2103 = vadd.f32 %v2099, %v2102
      %vm2104 = vweird.f32 %v697
      %vm2105 = vweird.f32 %v2099
      %vm2106 = vmor %vm2104, %vm2105
      %v2107 = vsel %vm2106, %v2099, %v2103
      %v2108 = vand.u32 2147483647, %v697
      %vm2109 = vcmp.eq.f32.partialorder %v2108, 8.507059e+37
      %v2110 = vand.u32 %v697, 2147483648
      %v2111 = vor.u32 1.1754944e-38, %v2110
      %v2112 = vsel %vm2109, %v2111, %v2107
      %v2113 = vmul.f32 1.0, %v2112
      %v2114 = vrcp.pop %v698
      %v2115 = vmul.f32 %v698, %v2114
      %v2116 = vsub.f32 1.0, %v2115
      %v2117 = vmul.f32 %v2114, %v2116
      %v2118 = vadd.f32 %v2114, %v2117
      %vm2119 = vweird.f32 %v698
      %vm2120 = vweird.f32 %v2114
      %vm2121 = vmor %vm2119, %vm2120
      %v2122 = vsel %vm2121, %v2114, %v2118
      %v2123 = vand.u32 2147483647, %v698
      %vm2124 = vcmp.eq.f32.partialorder %v2123, 8.507059e+37
      %v2125 = vand.u32 %v698, 2147483648
      %v2126 = vor.u32 1.1754944e-38, %v2125
      %v2127 = vsel %vm2124, %v2126, %v2122
      %v2128 = vmul.f32 1.0, %v2127
      %v2129 = vrcp.pop %v699
      %v2130 = vmul.f32 %v699, %v2129
      %v2131 = vsub.f32 1.0, %v2130
      %v2132 = vmul.f32 %v2129, %v2131
      %v2133 = vadd.f32 %v2129, %v2132
      %vm2134 = vweird.f32 %v699
      %vm2135 = vweird.f32 %v2129
      %vm2136 = vmor %vm2134, %vm2135
      %v2137 = vsel %vm2136, %v2129, %v2133
      %v2138 = vand.u32 2147483647, %v699
      %vm2139 = vcmp.eq.f32.partialorder %v2138, 8.507059e+37
      %v2140 = vand.u32 %v699, 2147483648
      %v2141 = vor.u32 1.1754944e-38, %v2140
      %v2142 = vsel %vm2139, %v2141, %v2137
      %v2143 = vmul.f32 1.0, %v2142
      %v2144 = vrcp.pop %v700
      %v2145 = vmul.f32 %v700, %v2144
      %v2146 = vsub.f32 1.0, %v2145
      %v2147 = vmul.f32 %v2144, %v2146
      %v2148 = vadd.f32 %v2144, %v2147
      %vm2149 = vweird.f32 %v700
      %vm2150 = vweird.f32 %v2144
      %vm2151 = vmor %vm2149, %vm2150
      %v2152 = vsel %vm2151, %v2144, %v2148
      %v2153 = vand.u32 2147483647, %v700
      %vm2154 = vcmp.eq.f32.partialorder %v2153, 8.507059e+37
      %v2155 = vand.u32 %v700, 2147483648
      %v2156 = vor.u32 1.1754944e-38, %v2155
      %v2157 = vsel %vm2154, %v2156, %v2152
      %v2158 = vmul.f32 1.0, %v2157
      %v2159 = vrcp.pop %v701
      %v2160 = vmul.f32 %v701, %v2159
      %v2161 = vsub.f32 1.0, %v2160
      %v2162 = vmul.f32 %v2159, %v2161
      %v2163 = vadd.f32 %v2159, %v2162
      %vm2164 = vweird.f32 %v701
      %vm2165 = vweird.f32 %v2159
      %vm2166 = vmor %vm2164, %vm2165
      %v2167 = vsel %vm2166, %v2159, %v2163
      %v2168 = vand.u32 2147483647, %v701
      %vm2169 = vcmp.eq.f32.partialorder %v2168, 8.507059e+37
      %v2170 = vand.u32 %v701, 2147483648
      %v2171 = vor.u32 1.1754944e-38, %v2170
      %v2172 = vsel %vm2169, %v2171, %v2167
      %v2173 = vmul.f32 1.0, %v2172
      %v2174 = vrcp.pop %v702
      %v2175 = vmul.f32 %v702, %v2174
      %v2176 = vsub.f32 1.0, %v2175
      %v2177 = vmul.f32 %v2174, %v2176
      %v2178 = vadd.f32 %v2174, %v2177
      %vm2179 = vweird.f32 %v702
      %vm2180 = vweird.f32 %v2174
      %vm2181 = vmor %vm2179, %vm2180
      %v2182 = vsel %vm2181, %v2174, %v2178
      %v2183 = vand.u32 2147483647, %v702
      %vm2184 = vcmp.eq.f32.partialorder %v2183, 8.507059e+37
      %v2185 = vand.u32 %v702, 2147483648
      %v2186 = vor.u32 1.1754944e-38, %v2185
      %v2187 = vsel %vm2184, %v2186, %v2182
      %v2188 = vmul.f32 1.0, %v2187
      %v2189 = vrcp.pop %v703
      %v2190 = vmul.f32 %v703, %v2189
      %v2191 = vsub.f32 1.0, %v2190
      %v2192 = vmul.f32 %v2189, %v2191
      %v2193 = vadd.f32 %v2189, %v2192
      %vm2194 = vweird.f32 %v703
      %vm2195 = vweird.f32 %v2189
      %vm2196 = vmor %vm2194, %vm2195
      %v2197 = vsel %vm2196, %v2189, %v2193
      %v2198 = vand.u32 2147483647, %v703
      %vm2199 = vcmp.eq.f32.partialorder %v2198, 8.507059e+37
      %v2200 = vand.u32 %v703, 2147483648
      %v2201 = vor.u32 1.1754944e-38, %v2200
      %v2202 = vsel %vm2199, %v2201, %v2197
      %v2203 = vmul.f32 1.0, %v2202
      %v2204 = vrcp.pop %v704
      %v2205 = vmul.f32 %v704, %v2204
      %v2206 = vsub.f32 1.0, %v2205
      %v2207 = vmul.f32 %v2204, %v2206
      %v2208 = vadd.f32 %v2204, %v2207
      %vm2209 = vweird.f32 %v704
      %vm2210 = vweird.f32 %v2204
      %vm2211 = vmor %vm2209, %vm2210
      %v2212 = vsel %vm2211, %v2204, %v2208
      %v2213 = vand.u32 2147483647, %v704
      %vm2214 = vcmp.eq.f32.partialorder %v2213, 8.507059e+37
      %v2215 = vand.u32 %v704, 2147483648
      %v2216 = vor.u32 1.1754944e-38, %v2215
      %v2217 = vsel %vm2214, %v2216, %v2212
      %v2218 = vmul.f32 1.0, %v2217
      %v2219 = vrcp.pop %v705
      %v2220 = vmul.f32 %v705, %v2219
      %v2221 = vsub.f32 1.0, %v2220
      %v2222 = vmul.f32 %v2219, %v2221
      %v2223 = vadd.f32 %v2219, %v2222
      %vm2224 = vweird.f32 %v705
      %vm2225 = vweird.f32 %v2219
      %vm2226 = vmor %vm2224, %vm2225
      %v2227 = vsel %vm2226, %v2219, %v2223
      %v2228 = vand.u32 2147483647, %v705
      %vm2229 = vcmp.eq.f32.partialorder %v2228, 8.507059e+37
      %v2230 = vand.u32 %v705, 2147483648
      %v2231 = vor.u32 1.1754944e-38, %v2230
      %v2232 = vsel %vm2229, %v2231, %v2227
      %v2233 = vmul.f32 1.0, %v2232
      %v2234 = vrcp.pop %v706
      %v2235 = vmul.f32 %v706, %v2234
      %v2236 = vsub.f32 1.0, %v2235
      %v2237 = vmul.f32 %v2234, %v2236
      %v2238 = vadd.f32 %v2234, %v2237
      %vm2239 = vweird.f32 %v706
      %vm2240 = vweird.f32 %v2234
      %vm2241 = vmor %vm2239, %vm2240
      %v2242 = vsel %vm2241, %v2234, %v2238
      %v2243 = vand.u32 2147483647, %v706
      %vm2244 = vcmp.eq.f32.partialorder %v2243, 8.507059e+37
      %v2245 = vand.u32 %v706, 2147483648
      %v2246 = vor.u32 1.1754944e-38, %v2245
      %v2247 = vsel %vm2244, %v2246, %v2242
      %v2248 = vmul.f32 1.0, %v2247
      %v2249 = vrcp.pop %v707
      %v2250 = vmul.f32 %v707, %v2249
      %v2251 = vsub.f32 1.0, %v2250
      %v2252 = vmul.f32 %v2249, %v2251
      %v2253 = vadd.f32 %v2249, %v2252
      %vm2254 = vweird.f32 %v707
      %vm2255 = vweird.f32 %v2249
      %vm2256 = vmor %vm2254, %vm2255
      %v2257 = vsel %vm2256, %v2249, %v2253
      %v2258 = vand.u32 2147483647, %v707
      %vm2259 = vcmp.eq.f32.partialorder %v2258, 8.507059e+37
      %v2260 = vand.u32 %v707, 2147483648
      %v2261 = vor.u32 1.1754944e-38, %v2260
      %v2262 = vsel %vm2259, %v2261, %v2257
      %v2263 = vmul.f32 1.0, %v2262
      %v2264 = vrcp.pop %v708
      %v2265 = vmul.f32 %v708, %v2264
      %v2266 = vsub.f32 1.0, %v2265
      %v2267 = vmul.f32 %v2264, %v2266
      %v2268 = vadd.f32 %v2264, %v2267
      %vm2269 = vweird.f32 %v708
      %vm2270 = vweird.f32 %v2264
      %vm2271 = vmor %vm2269, %vm2270
      %v2272 = vsel %vm2271, %v2264, %v2268
      %v2273 = vand.u32 2147483647, %v708
      %vm2274 = vcmp.eq.f32.partialorder %v2273, 8.507059e+37
      %v2275 = vand.u32 %v708, 2147483648
      %v2276 = vor.u32 1.1754944e-38, %v2275
      %v2277 = vsel %vm2274, %v2276, %v2272
      %v2278 = vmul.f32 1.0, %v2277
      %v2279 = vrcp.pop %v709
      %v2280 = vmul.f32 %v709, %v2279
      %v2281 = vsub.f32 1.0, %v2280
      %v2282 = vmul.f32 %v2279, %v2281
      %v2283 = vadd.f32 %v2279, %v2282
      %vm2284 = vweird.f32 %v709
      %vm2285 = vweird.f32 %v2279
      %vm2286 = vmor %vm2284, %vm2285
      %v2287 = vsel %vm2286, %v2279, %v2283
      %v2288 = vand.u32 2147483647, %v709
      %vm2289 = vcmp.eq.f32.partialorder %v2288, 8.507059e+37
      %v2290 = vand.u32 %v709, 2147483648
      %v2291 = vor.u32 1.1754944e-38, %v2290
      %v2292 = vsel %vm2289, %v2291, %v2287
      %v2293 = vmul.f32 1.0, %v2292
      %v2294 = vrcp.pop %v710
      %v2295 = vmul.f32 %v710, %v2294
      %v2296 = vsub.f32 1.0, %v2295
      %v2297 = vmul.f32 %v2294, %v2296
      %v2298 = vadd.f32 %v2294, %v2297
      %vm2299 = vweird.f32 %v710
      %vm2300 = vweird.f32 %v2294
      %vm2301 = vmor %vm2299, %vm2300
      %v2302 = vsel %vm2301, %v2294, %v2298
      %v2303 = vand.u32 2147483647, %v710
      %vm2304 = vcmp.eq.f32.partialorder %v2303, 8.507059e+37
      %v2305 = vand.u32 %v710, 2147483648
      %v2306 = vor.u32 1.1754944e-38, %v2305
      %v2307 = vsel %vm2304, %v2306, %v2302
      %v2308 = vmul.f32 1.0, %v2307
      %v2309 = vrcp.pop %v711
      %v2310 = vmul.f32 %v711, %v2309
      %v2311 = vsub.f32 1.0, %v2310
      %v2312 = vmul.f32 %v2309, %v2311
      %v2313 = vadd.f32 %v2309, %v2312
      %vm2314 = vweird.f32 %v711
      %vm2315 = vweird.f32 %v2309
      %vm2316 = vmor %vm2314, %vm2315
      %v2317 = vsel %vm2316, %v2309, %v2313
      %v2318 = vand.u32 2147483647, %v711
      %vm2319 = vcmp.eq.f32.partialorder %v2318, 8.507059e+37
      %v2320 = vand.u32 %v711, 2147483648
      %v2321 = vor.u32 1.1754944e-38, %v2320
      %v2322 = vsel %vm2319, %v2321, %v2317
      %v2323 = vmul.f32 1.0, %v2322
      %v2324 = vrcp.pop %v712
      %v2325 = vmul.f32 %v712, %v2324
      %v2326 = vsub.f32 1.0, %v2325
      %v2327 = vmul.f32 %v2324, %v2326
      %v2328 = vadd.f32 %v2324, %v2327
      %vm2329 = vweird.f32 %v712
      %vm2330 = vweird.f32 %v2324
      %vm2331 = vmor %vm2329, %vm2330
      %v2332 = vsel %vm2331, %v2324, %v2328
      %v2333 = vand.u32 2147483647, %v712
      %vm2334 = vcmp.eq.f32.partialorder %v2333, 8.507059e+37
      %v2335 = vand.u32 %v712, 2147483648
      %v2336 = vor.u32 1.1754944e-38, %v2335
      %v2337 = vsel %vm2334, %v2336, %v2332
      %v2338 = vmul.f32 1.0, %v2337
      %v2339 = vrcp.pop %v713
      %v2340 = vmul.f32 %v713, %v2339
      %v2341 = vsub.f32 1.0, %v2340
      %v2342 = vmul.f32 %v2339, %v2341
      %v2343 = vadd.f32 %v2339, %v2342
      %vm2344 = vweird.f32 %v713
      %vm2345 = vweird.f32 %v2339
      %vm2346 = vmor %vm2344, %vm2345
      %v2347 = vsel %vm2346, %v2339, %v2343
      %v2348 = vand.u32 2147483647, %v713
      %vm2349 = vcmp.eq.f32.partialorder %v2348, 8.507059e+37
      %v2350 = vand.u32 %v713, 2147483648
      %v2351 = vor.u32 1.1754944e-38, %v2350
      %v2352 = vsel %vm2349, %v2351, %v2347
      %v2353 = vmul.f32 1.0, %v2352
      %v2354 = vrcp.pop %v714
      %v2355 = vmul.f32 %v714, %v2354
      %v2356 = vsub.f32 1.0, %v2355
      %v2357 = vmul.f32 %v2354, %v2356
      %v2358 = vadd.f32 %v2354, %v2357
      %vm2359 = vweird.f32 %v714
      %vm2360 = vweird.f32 %v2354
      %vm2361 = vmor %vm2359, %vm2360
      %v2362 = vsel %vm2361, %v2354, %v2358
      %v2363 = vand.u32 2147483647, %v714
      %vm2364 = vcmp.eq.f32.partialorder %v2363, 8.507059e+37
      %v2365 = vand.u32 %v714, 2147483648
      %v2366 = vor.u32 1.1754944e-38, %v2365
      %v2367 = vsel %vm2364, %v2366, %v2362
      %v2368 = vmul.f32 1.0, %v2367
      %v2369 = vrcp.pop %v715
      %v2370 = vmul.f32 %v715, %v2369
      %v2371 = vsub.f32 1.0, %v2370
      %v2372 = vmul.f32 %v2369, %v2371
      %v2373 = vadd.f32 %v2369, %v2372
      %vm2374 = vweird.f32 %v715
      %vm2375 = vweird.f32 %v2369
      %vm2376 = vmor %vm2374, %vm2375
      %v2377 = vsel %vm2376, %v2369, %v2373
      %v2378 = vand.u32 2147483647, %v715
      %vm2379 = vcmp.eq.f32.partialorder %v2378, 8.507059e+37
      %v2380 = vand.u32 %v715, 2147483648
      %v2381 = vor.u32 1.1754944e-38, %v2380
      %v2382 = vsel %vm2379, %v2381, %v2377
      %v2383 = vmul.f32 1.0, %v2382
      %v2384 = vrcp.pop %v716
      %v2385 = vmul.f32 %v716, %v2384
      %v2386 = vsub.f32 1.0, %v2385
      %v2387 = vmul.f32 %v2384, %v2386
      %v2388 = vadd.f32 %v2384, %v2387
      %vm2389 = vweird.f32 %v716
      %vm2390 = vweird.f32 %v2384
      %vm2391 = vmor %vm2389, %vm2390
      %v2392 = vsel %vm2391, %v2384, %v2388
      %v2393 = vand.u32 2147483647, %v716
      %vm2394 = vcmp.eq.f32.partialorder %v2393, 8.507059e+37
      %v2395 = vand.u32 %v716, 2147483648
      %v2396 = vor.u32 1.1754944e-38, %v2395
      %v2397 = vsel %vm2394, %v2396, %v2392
      %v2398 = vmul.f32 1.0, %v2397
      %v2399 = vrcp.pop %v717
      %v2400 = vmul.f32 %v717, %v2399
      %v2401 = vsub.f32 1.0, %v2400
      %v2402 = vmul.f32 %v2399, %v2401
      %v2403 = vadd.f32 %v2399, %v2402
      %vm2404 = vweird.f32 %v717
      %vm2405 = vweird.f32 %v2399
      %vm2406 = vmor %vm2404, %vm2405
      %v2407 = vsel %vm2406, %v2399, %v2403
      %v2408 = vand.u32 2147483647, %v717
      %vm2409 = vcmp.eq.f32.partialorder %v2408, 8.507059e+37
      %v2410 = vand.u32 %v717, 2147483648
      %v2411 = vor.u32 1.1754944e-38, %v2410
      %v2412 = vsel %vm2409, %v2411, %v2407
      %v2413 = vmul.f32 1.0, %v2412
      %v2414 = vrcp.pop %v718
      %v2415 = vmul.f32 %v718, %v2414
      %v2416 = vsub.f32 1.0, %v2415
      %v2417 = vmul.f32 %v2414, %v2416
      %v2418 = vadd.f32 %v2414, %v2417
      %vm2419 = vweird.f32 %v718
      %vm2420 = vweird.f32 %v2414
      %vm2421 = vmor %vm2419, %vm2420
      %v2422 = vsel %vm2421, %v2414, %v2418
      %v2423 = vand.u32 2147483647, %v718
      %vm2424 = vcmp.eq.f32.partialorder %v2423, 8.507059e+37
      %v2425 = vand.u32 %v718, 2147483648
      %v2426 = vor.u32 1.1754944e-38, %v2425
      %v2427 = vsel %vm2424, %v2426, %v2422
      %v2428 = vmul.f32 1.0, %v2427
      %v2429 = vld [vmem:[%s139] sm:$0xff]
      %v2430 = vld [vmem:[%s139 + $0x8] sm:$0xff]
      %v2431 = vld [vmem:[%s139 + $0x10] sm:$0xff]
      %v2432 = vld [vmem:[%s139 + $0x18] sm:$0xff]
      %v2433 = vld [vmem:[%s139 + $0x20] sm:$0xff]
      %v2434 = vld [vmem:[%s139 + $0x28] sm:$0xff]
      %v2435 = vld [vmem:[%s139 + $0x30] sm:$0xff]
      %v2436 = vld [vmem:[%s139 + $0x38] sm:$0xff]
      %v2437 = vld [vmem:[%s139 + $0x40] sm:$0xff]
      %v2438 = vld [vmem:[%s139 + $0x48] sm:$0xff]
      %v2439 = vld [vmem:[%s139 + $0x50] sm:$0xff]
      %v2440 = vld [vmem:[%s139 + $0x58] sm:$0xff]
      %v2441 = vld [vmem:[%s139 + $0x60] sm:$0xff]
      %v2442 = vld [vmem:[%s139 + $0x68] sm:$0xff]
      %v2443 = vld [vmem:[%s139 + $0x70] sm:$0xff]
      %v2444 = vld [vmem:[%s139 + $0x78] sm:$0xff]
      %v2445 = vld [vmem:[%s139 + $0x80] sm:$0xff]
      %v2446 = vld [vmem:[%s139 + $0x88] sm:$0xff]
      %v2447 = vld [vmem:[%s139 + $0x90] sm:$0xff]
      %v2448 = vld [vmem:[%s139 + $0x98] sm:$0xff]
      %v2449 = vld [vmem:[%s139 + $0xa0] sm:$0xff]
      %v2450 = vld [vmem:[%s139 + $0xa8] sm:$0xff]
      %v2451 = vld [vmem:[%s139 + $0xb0] sm:$0xff]
      %v2452 = vld [vmem:[%s139 + $0xb8] sm:$0xff]
      %v2453 = vld [vmem:[%s139 + $0xc0] sm:$0xff]
      %v2454 = vld [vmem:[%s139 + $0xc8] sm:$0xff]
      %v2455 = vld [vmem:[%s139 + $0xd0] sm:$0xff]
      %v2456 = vld [vmem:[%s139 + $0xd8] sm:$0xff]
      %v2457 = vld [vmem:[%s139 + $0xe0] sm:$0xff]
      %v2458 = vld [vmem:[%s139 + $0xe8] sm:$0xff]
      %v2459 = vld [vmem:[%s139 + $0xf0] sm:$0xff]
      %v2460 = vld [vmem:[%s139 + $0xf8] sm:$0xff]
      %v2461 = vld [vmem:[%s139 + $0x100] sm:$0xff]
      %v2462 = vld [vmem:[%s139 + $0x108] sm:$0xff]
      %v2463 = vld [vmem:[%s139 + $0x110] sm:$0xff]
      %v2464 = vld [vmem:[%s139 + $0x118] sm:$0xff]
      %v2465 = vld [vmem:[%s139 + $0x120] sm:$0xff]
      %v2466 = vld [vmem:[%s139 + $0x128] sm:$0xff]
      %v2467 = vld [vmem:[%s139 + $0x130] sm:$0xff]
      %v2468 = vld [vmem:[%s139 + $0x138] sm:$0xff]
      %v2469 = vld [vmem:[%s139 + $0x140] sm:$0xff]
      %v2470 = vld [vmem:[%s139 + $0x148] sm:$0xff]
      %v2471 = vld [vmem:[%s139 + $0x150] sm:$0xff]
      %v2472 = vld [vmem:[%s139 + $0x158] sm:$0xff]
      %v2473 = vld [vmem:[%s139 + $0x160] sm:$0xff]
      %v2474 = vld [vmem:[%s139 + $0x168] sm:$0xff]
      %v2475 = vld [vmem:[%s139 + $0x170] sm:$0xff]
      %v2476 = vld [vmem:[%s139 + $0x178] sm:$0xff]
      %v2477 = vld [vmem:[%s139 + $0x180] sm:$0xff]
      %v2478 = vld [vmem:[%s139 + $0x188] sm:$0xff]
      %v2479 = vld [vmem:[%s139 + $0x190] sm:$0xff]
      %v2480 = vld [vmem:[%s139 + $0x198] sm:$0xff]
      %v2481 = vld [vmem:[%s139 + $0x1a0] sm:$0xff]
      %v2482 = vld [vmem:[%s139 + $0x1a8] sm:$0xff]
      %v2483 = vld [vmem:[%s139 + $0x1b0] sm:$0xff]
      %v2484 = vld [vmem:[%s139 + $0x1b8] sm:$0xff]
      %v2485 = vld [vmem:[%s139 + $0x1c0] sm:$0xff]
      %v2486 = vld [vmem:[%s139 + $0x1c8] sm:$0xff]
      %v2487 = vld [vmem:[%s139 + $0x1d0] sm:$0xff]
      %v2488 = vld [vmem:[%s139 + $0x1d8] sm:$0xff]
      %v2489 = vld [vmem:[%s139 + $0x1e0] sm:$0xff]
      %v2490 = vld [vmem:[%s139 + $0x1e8] sm:$0xff]
      %v2491 = vld [vmem:[%s139 + $0x1f0] sm:$0xff]
      %v2492 = vld [vmem:[%s139 + $0x1f8] sm:$0xff]
      %v2493 = vld [vmem:[%s139 + $0x200] sm:$0xff]
      %v2494 = vld [vmem:[%s139 + $0x208] sm:$0xff]
      %v2495 = vld [vmem:[%s139 + $0x210] sm:$0xff]
      %v2496 = vld [vmem:[%s139 + $0x218] sm:$0xff]
      %v2497 = vld [vmem:[%s139 + $0x220] sm:$0xff]
      %v2498 = vld [vmem:[%s139 + $0x228] sm:$0xff]
      %v2499 = vld [vmem:[%s139 + $0x230] sm:$0xff]
      %v2500 = vld [vmem:[%s139 + $0x238] sm:$0xff]
      %v2501 = vld [vmem:[%s139 + $0x240] sm:$0xff]
      %v2502 = vld [vmem:[%s139 + $0x248] sm:$0xff]
      %v2503 = vld [vmem:[%s139 + $0x250] sm:$0xff]
      %v2504 = vld [vmem:[%s139 + $0x258] sm:$0xff]
      %v2505 = vld [vmem:[%s139 + $0x260] sm:$0xff]
      %v2506 = vld [vmem:[%s139 + $0x268] sm:$0xff]
      %v2507 = vld [vmem:[%s139 + $0x270] sm:$0xff]
      %v2508 = vld [vmem:[%s139 + $0x278] sm:$0xff]
      %v2509 = vld [vmem:[%s139 + $0x280] sm:$0xff]
      %v2510 = vld [vmem:[%s139 + $0x288] sm:$0xff]
      %v2511 = vld [vmem:[%s139 + $0x290] sm:$0xff]
      %v2512 = vld [vmem:[%s139 + $0x298] sm:$0xff]
      %v2513 = vld [vmem:[%s139 + $0x2a0] sm:$0xff]
      %v2514 = vld [vmem:[%s139 + $0x2a8] sm:$0xff]
      %v2515 = vld [vmem:[%s139 + $0x2b0] sm:$0xff]
      %v2516 = vld [vmem:[%s139 + $0x2b8] sm:$0xff]
      %v2517 = vld [vmem:[%s139 + $0x2c0] sm:$0xff]
      %v2518 = vld [vmem:[%s139 + $0x2c8] sm:$0xff]
      %v2519 = vld [vmem:[%s139 + $0x2d0] sm:$0xff]
      %v2520 = vld [vmem:[%s139 + $0x2d8] sm:$0xff]
      %v2521 = vld [vmem:[%s139 + $0x2e0] sm:$0xff]
      %v2522 = vld [vmem:[%s139 + $0x2e8] sm:$0xff]
      %v2523 = vld [vmem:[%s139 + $0x2f0] sm:$0xff]
      %v2524 = vld [vmem:[%s139 + $0x2f8] sm:$0xff]
      %v2525 = vld [vmem:[%s139 + $0x300] sm:$0xff]
      %v2526 = vld [vmem:[%s139 + $0x308] sm:$0xff]
      %v2527 = vld [vmem:[%s139 + $0x310] sm:$0xff]
      %v2528 = vld [vmem:[%s139 + $0x318] sm:$0xff]
      %v2529 = vld [vmem:[%s139 + $0x320] sm:$0xff]
      %v2530 = vld [vmem:[%s139 + $0x328] sm:$0xff]
      %v2531 = vld [vmem:[%s139 + $0x330] sm:$0xff]
      %v2532 = vld [vmem:[%s139 + $0x338] sm:$0xff]
      %v2533 = vld [vmem:[%s139 + $0x340] sm:$0xff]
      %v2534 = vld [vmem:[%s139 + $0x348] sm:$0xff]
      %v2535 = vld [vmem:[%s139 + $0x350] sm:$0xff]
      %v2536 = vld [vmem:[%s139 + $0x358] sm:$0xff]
      %v2537 = vld [vmem:[%s139 + $0x360] sm:$0xff]
      %v2538 = vld [vmem:[%s139 + $0x368] sm:$0xff]
      %v2539 = vld [vmem:[%s139 + $0x370] sm:$0xff]
      %v2540 = vld [vmem:[%s139 + $0x378] sm:$0xff]
      %v2541 = vld [vmem:[%s139 + $0x380] sm:$0xff]
      %v2542 = vld [vmem:[%s139 + $0x388] sm:$0xff]
      %2544 = vset.pattern.permute.xlu0 0
      %2545 = vperm.xlu0 %2544, %v733
      %v2546 = vpop.permute.xlu0 %2545
      %2549 = vset.pattern.permute.xlu0 0
      %2550 = vperm.xlu0 %2549, %v748
      %v2551 = vpop.permute.xlu0 %2550
      %2554 = vset.pattern.permute.xlu0 0
      %2555 = vperm.xlu0 %2554, %v763
      %v2556 = vpop.permute.xlu0 %2555
      %2559 = vset.pattern.permute.xlu0 0
      %2560 = vperm.xlu0 %2559, %v778
      %v2561 = vpop.permute.xlu0 %2560
      %2564 = vset.pattern.permute.xlu0 0
      %2565 = vperm.xlu0 %2564, %v793
      %v2566 = vpop.permute.xlu0 %2565
      %2569 = vset.pattern.permute.xlu0 0
      %2570 = vperm.xlu0 %2569, %v808
      %v2571 = vpop.permute.xlu0 %2570
      %2574 = vset.pattern.permute.xlu0 0
      %2575 = vperm.xlu0 %2574, %v823
      %v2576 = vpop.permute.xlu0 %2575
      %2579 = vset.pattern.permute.xlu0 0
      %2580 = vperm.xlu0 %2579, %v838
      %v2581 = vpop.permute.xlu0 %2580
      %2584 = vset.pattern.permute.xlu0 0
      %2585 = vperm.xlu0 %2584, %v853
      %v2586 = vpop.permute.xlu0 %2585
      %2589 = vset.pattern.permute.xlu0 0
      %2590 = vperm.xlu0 %2589, %v868
      %v2591 = vpop.permute.xlu0 %2590
      %2594 = vset.pattern.permute.xlu0 0
      %2595 = vperm.xlu0 %2594, %v883
      %v2596 = vpop.permute.xlu0 %2595
      %2599 = vset.pattern.permute.xlu0 0
      %2600 = vperm.xlu0 %2599, %v898
      %v2601 = vpop.permute.xlu0 %2600
      %2604 = vset.pattern.permute.xlu0 0
      %2605 = vperm.xlu0 %2604, %v913
      %v2606 = vpop.permute.xlu0 %2605
      %2609 = vset.pattern.permute.xlu0 0
      %2610 = vperm.xlu0 %2609, %v928
      %v2611 = vpop.permute.xlu0 %2610
      %2614 = vset.pattern.permute.xlu0 0
      %2615 = vperm.xlu0 %2614, %v943
      %v2616 = vpop.permute.xlu0 %2615
      %2619 = vset.pattern.permute.xlu0 0
      %2620 = vperm.xlu0 %2619, %v958
      %v2621 = vpop.permute.xlu0 %2620
      %2624 = vset.pattern.permute.xlu0 0
      %2625 = vperm.xlu0 %2624, %v973
      %v2626 = vpop.permute.xlu0 %2625
      %2629 = vset.pattern.permute.xlu0 0
      %2630 = vperm.xlu0 %2629, %v988
      %v2631 = vpop.permute.xlu0 %2630
      %2634 = vset.pattern.permute.xlu0 0
      %2635 = vperm.xlu0 %2634, %v1003
      %v2636 = vpop.permute.xlu0 %2635
      %2639 = vset.pattern.permute.xlu0 0
      %2640 = vperm.xlu0 %2639, %v1018
      %v2641 = vpop.permute.xlu0 %2640
      %2644 = vset.pattern.permute.xlu0 0
      %2645 = vperm.xlu0 %2644, %v1033
      %v2646 = vpop.permute.xlu0 %2645
      %2649 = vset.pattern.permute.xlu0 0
      %2650 = vperm.xlu0 %2649, %v1048
      %v2651 = vpop.permute.xlu0 %2650
      %2654 = vset.pattern.permute.xlu0 0
      %2655 = vperm.xlu0 %2654, %v1063
      %v2656 = vpop.permute.xlu0 %2655
      %2659 = vset.pattern.permute.xlu0 0
      %2660 = vperm.xlu0 %2659, %v1078
      %v2661 = vpop.permute.xlu0 %2660
      %2664 = vset.pattern.permute.xlu0 0
      %2665 = vperm.xlu0 %2664, %v1093
      %v2666 = vpop.permute.xlu0 %2665
      %2669 = vset.pattern.permute.xlu0 0
      %2670 = vperm.xlu0 %2669, %v1108
      %v2671 = vpop.permute.xlu0 %2670
      %2674 = vset.pattern.permute.xlu0 0
      %2675 = vperm.xlu0 %2674, %v1123
      %v2676 = vpop.permute.xlu0 %2675
      %2679 = vset.pattern.permute.xlu0 0
      %2680 = vperm.xlu0 %2679, %v1138
      %v2681 = vpop.permute.xlu0 %2680
      %2684 = vset.pattern.permute.xlu0 0
      %2685 = vperm.xlu0 %2684, %v1153
      %v2686 = vpop.permute.xlu0 %2685
      %2689 = vset.pattern.permute.xlu0 0
      %2690 = vperm.xlu0 %2689, %v1168
      %v2691 = vpop.permute.xlu0 %2690
      %2694 = vset.pattern.permute.xlu0 0
      %2695 = vperm.xlu0 %2694, %v1183
      %v2696 = vpop.permute.xlu0 %2695
      %2699 = vset.pattern.permute.xlu0 0
      %2700 = vperm.xlu0 %2699, %v1198
      %v2701 = vpop.permute.xlu0 %2700
      %2704 = vset.pattern.permute.xlu0 0
      %2705 = vperm.xlu0 %2704, %v1213
      %v2706 = vpop.permute.xlu0 %2705
      %2709 = vset.pattern.permute.xlu0 0
      %2710 = vperm.xlu0 %2709, %v1228
      %v2711 = vpop.permute.xlu0 %2710
      %2714 = vset.pattern.permute.xlu0 0
      %2715 = vperm.xlu0 %2714, %v1243
      %v2716 = vpop.permute.xlu0 %2715
      %2719 = vset.pattern.permute.xlu0 0
      %2720 = vperm.xlu0 %2719, %v1258
      %v2721 = vpop.permute.xlu0 %2720
      %2724 = vset.pattern.permute.xlu0 0
      %2725 = vperm.xlu0 %2724, %v1273
      %v2726 = vpop.permute.xlu0 %2725
      %2729 = vset.pattern.permute.xlu0 0
      %2730 = vperm.xlu0 %2729, %v1288
      %v2731 = vpop.permute.xlu0 %2730
      %2734 = vset.pattern.permute.xlu0 0
      %2735 = vperm.xlu0 %2734, %v1303
      %v2736 = vpop.permute.xlu0 %2735
      %2739 = vset.pattern.permute.xlu0 0
      %2740 = vperm.xlu0 %2739, %v1318
      %v2741 = vpop.permute.xlu0 %2740
      %2744 = vset.pattern.permute.xlu0 0
      %2745 = vperm.xlu0 %2744, %v1333
      %v2746 = vpop.permute.xlu0 %2745
      %2749 = vset.pattern.permute.xlu0 0
      %2750 = vperm.xlu0 %2749, %v1348
      %v2751 = vpop.permute.xlu0 %2750
      %2754 = vset.pattern.permute.xlu0 0
      %2755 = vperm.xlu0 %2754, %v1363
      %v2756 = vpop.permute.xlu0 %2755
      %2759 = vset.pattern.permute.xlu0 0
      %2760 = vperm.xlu0 %2759, %v1378
      %v2761 = vpop.permute.xlu0 %2760
      %2764 = vset.pattern.permute.xlu0 0
      %2765 = vperm.xlu0 %2764, %v1393
      %v2766 = vpop.permute.xlu0 %2765
      %2769 = vset.pattern.permute.xlu0 0
      %2770 = vperm.xlu0 %2769, %v1408
      %v2771 = vpop.permute.xlu0 %2770
      %2774 = vset.pattern.permute.xlu0 0
      %2775 = vperm.xlu0 %2774, %v1423
      %v2776 = vpop.permute.xlu0 %2775
      %2779 = vset.pattern.permute.xlu0 0
      %2780 = vperm.xlu0 %2779, %v1438
      %v2781 = vpop.permute.xlu0 %2780
      %2784 = vset.pattern.permute.xlu0 0
      %2785 = vperm.xlu0 %2784, %v1453
      %v2786 = vpop.permute.xlu0 %2785
      %2789 = vset.pattern.permute.xlu0 0
      %2790 = vperm.xlu0 %2789, %v1468
      %v2791 = vpop.permute.xlu0 %2790
      %2794 = vset.pattern.permute.xlu0 0
      %2795 = vperm.xlu0 %2794, %v1483
      %v2796 = vpop.permute.xlu0 %2795
      %2799 = vset.pattern.permute.xlu0 0
      %2800 = vperm.xlu0 %2799, %v1498
      %v2801 = vpop.permute.xlu0 %2800
      %2804 = vset.pattern.permute.xlu0 0
      %2805 = vperm.xlu0 %2804, %v1513
      %v2806 = vpop.permute.xlu0 %2805
      %2809 = vset.pattern.permute.xlu0 0
      %2810 = vperm.xlu0 %2809, %v1528
      %v2811 = vpop.permute.xlu0 %2810
      %2814 = vset.pattern.permute.xlu0 0
      %2815 = vperm.xlu0 %2814, %v1543
      %v2816 = vpop.permute.xlu0 %2815
      %2819 = vset.pattern.permute.xlu0 0
      %2820 = vperm.xlu0 %2819, %v1558
      %v2821 = vpop.permute.xlu0 %2820
      %2824 = vset.pattern.permute.xlu0 0
      %2825 = vperm.xlu0 %2824, %v1573
      %v2826 = vpop.permute.xlu0 %2825
      %2829 = vset.pattern.permute.xlu0 0
      %2830 = vperm.xlu0 %2829, %v1588
      %v2831 = vpop.permute.xlu0 %2830
      %2834 = vset.pattern.permute.xlu0 0
      %2835 = vperm.xlu0 %2834, %v1603
      %v2836 = vpop.permute.xlu0 %2835
      %2839 = vset.pattern.permute.xlu0 0
      %2840 = vperm.xlu0 %2839, %v1618
      %v2841 = vpop.permute.xlu0 %2840
      %2844 = vset.pattern.permute.xlu0 0
      %2845 = vperm.xlu0 %2844, %v1633
      %v2846 = vpop.permute.xlu0 %2845
      %2849 = vset.pattern.permute.xlu0 0
      %2850 = vperm.xlu0 %2849, %v1648
      %v2851 = vpop.permute.xlu0 %2850
      %2854 = vset.pattern.permute.xlu0 0
      %2855 = vperm.xlu0 %2854, %v1663
      %v2856 = vpop.permute.xlu0 %2855
      %2859 = vset.pattern.permute.xlu0 0
      %2860 = vperm.xlu0 %2859, %v1678
      %v2861 = vpop.permute.xlu0 %2860
      %2864 = vset.pattern.permute.xlu0 0
      %2865 = vperm.xlu0 %2864, %v1693
      %v2866 = vpop.permute.xlu0 %2865
      %2869 = vset.pattern.permute.xlu0 0
      %2870 = vperm.xlu0 %2869, %v1708
      %v2871 = vpop.permute.xlu0 %2870
      %2874 = vset.pattern.permute.xlu0 0
      %2875 = vperm.xlu0 %2874, %v1723
      %v2876 = vpop.permute.xlu0 %2875
      %2879 = vset.pattern.permute.xlu0 0
      %2880 = vperm.xlu0 %2879, %v1738
      %v2881 = vpop.permute.xlu0 %2880
      %2884 = vset.pattern.permute.xlu0 0
      %2885 = vperm.xlu0 %2884, %v1753
      %v2886 = vpop.permute.xlu0 %2885
      %2889 = vset.pattern.permute.xlu0 0
      %2890 = vperm.xlu0 %2889, %v1768
      %v2891 = vpop.permute.xlu0 %2890
      %2894 = vset.pattern.permute.xlu0 0
      %2895 = vperm.xlu0 %2894, %v1783
      %v2896 = vpop.permute.xlu0 %2895
      %2899 = vset.pattern.permute.xlu0 0
      %2900 = vperm.xlu0 %2899, %v1798
      %v2901 = vpop.permute.xlu0 %2900
      %2904 = vset.pattern.permute.xlu0 0
      %2905 = vperm.xlu0 %2904, %v1813
      %v2906 = vpop.permute.xlu0 %2905
      %2909 = vset.pattern.permute.xlu0 0
      %2910 = vperm.xlu0 %2909, %v1828
      %v2911 = vpop.permute.xlu0 %2910
      %2914 = vset.pattern.permute.xlu0 0
      %2915 = vperm.xlu0 %2914, %v1843
      %v2916 = vpop.permute.xlu0 %2915
      %2919 = vset.pattern.permute.xlu0 0
      %2920 = vperm.xlu0 %2919, %v1858
      %v2921 = vpop.permute.xlu0 %2920
      %2924 = vset.pattern.permute.xlu0 0
      %2925 = vperm.xlu0 %2924, %v1873
      %v2926 = vpop.permute.xlu0 %2925
      %2929 = vset.pattern.permute.xlu0 0
      %2930 = vperm.xlu0 %2929, %v1888
      %v2931 = vpop.permute.xlu0 %2930
      %2934 = vset.pattern.permute.xlu0 0
      %2935 = vperm.xlu0 %2934, %v1903
      %v2936 = vpop.permute.xlu0 %2935
      %2939 = vset.pattern.permute.xlu0 0
      %2940 = vperm.xlu0 %2939, %v1918
      %v2941 = vpop.permute.xlu0 %2940
      %2944 = vset.pattern.permute.xlu0 0
      %2945 = vperm.xlu0 %2944, %v1933
      %v2946 = vpop.permute.xlu0 %2945
      %2949 = vset.pattern.permute.xlu0 0
      %2950 = vperm.xlu0 %2949, %v1948
      %v2951 = vpop.permute.xlu0 %2950
      %2954 = vset.pattern.permute.xlu0 0
      %2955 = vperm.xlu0 %2954, %v1963
      %v2956 = vpop.permute.xlu0 %2955
      %2959 = vset.pattern.permute.xlu0 0
      %2960 = vperm.xlu0 %2959, %v1978
      %v2961 = vpop.permute.xlu0 %2960
      %2964 = vset.pattern.permute.xlu0 0
      %2965 = vperm.xlu0 %2964, %v1993
      %v2966 = vpop.permute.xlu0 %2965
      %2969 = vset.pattern.permute.xlu0 0
      %2970 = vperm.xlu0 %2969, %v2008
      %v2971 = vpop.permute.xlu0 %2970
      %2974 = vset.pattern.permute.xlu0 0
      %2975 = vperm.xlu0 %2974, %v2023
      %v2976 = vpop.permute.xlu0 %2975
      %2979 = vset.pattern.permute.xlu0 0
      %2980 = vperm.xlu0 %2979, %v2038
      %v2981 = vpop.permute.xlu0 %2980
      %2984 = vset.pattern.permute.xlu0 0
      %2985 = vperm.xlu0 %2984, %v2053
      %v2986 = vpop.permute.xlu0 %2985
      %2989 = vset.pattern.permute.xlu0 0
      %2990 = vperm.xlu0 %2989, %v2068
      %v2991 = vpop.permute.xlu0 %2990
      %2994 = vset.pattern.permute.xlu0 0
      %2995 = vperm.xlu0 %2994, %v2083
      %v2996 = vpop.permute.xlu0 %2995
      %2999 = vset.pattern.permute.xlu0 0
      %3000 = vperm.xlu0 %2999, %v2098
      %v3001 = vpop.permute.xlu0 %3000
      %3004 = vset.pattern.permute.xlu0 0
      %3005 = vperm.xlu0 %3004, %v2113
      %v3006 = vpop.permute.xlu0 %3005
      %3009 = vset.pattern.permute.xlu0 0
      %3010 = vperm.xlu0 %3009, %v2128
      %v3011 = vpop.permute.xlu0 %3010
      %3014 = vset.pattern.permute.xlu0 0
      %3015 = vperm.xlu0 %3014, %v2143
      %v3016 = vpop.permute.xlu0 %3015
      %3019 = vset.pattern.permute.xlu0 0
      %3020 = vperm.xlu0 %3019, %v2158
      %v3021 = vpop.permute.xlu0 %3020
      %3024 = vset.pattern.permute.xlu0 0
      %3025 = vperm.xlu0 %3024, %v2173
      %v3026 = vpop.permute.xlu0 %3025
      %3029 = vset.pattern.permute.xlu0 0
      %3030 = vperm.xlu0 %3029, %v2188
      %v3031 = vpop.permute.xlu0 %3030
      %3034 = vset.pattern.permute.xlu0 0
      %3035 = vperm.xlu0 %3034, %v2203
      %v3036 = vpop.permute.xlu0 %3035
      %3039 = vset.pattern.permute.xlu0 0
      %3040 = vperm.xlu0 %3039, %v2218
      %v3041 = vpop.permute.xlu0 %3040
      %3044 = vset.pattern.permute.xlu0 0
      %3045 = vperm.xlu0 %3044, %v2233
      %v3046 = vpop.permute.xlu0 %3045
      %3049 = vset.pattern.permute.xlu0 0
      %3050 = vperm.xlu0 %3049, %v2248
      %v3051 = vpop.permute.xlu0 %3050
      %3054 = vset.pattern.permute.xlu0 0
      %3055 = vperm.xlu0 %3054, %v2263
      %v3056 = vpop.permute.xlu0 %3055
      %3059 = vset.pattern.permute.xlu0 0
      %3060 = vperm.xlu0 %3059, %v2278
      %v3061 = vpop.permute.xlu0 %3060
      %3064 = vset.pattern.permute.xlu0 0
      %3065 = vperm.xlu0 %3064, %v2293
      %v3066 = vpop.permute.xlu0 %3065
      %3069 = vset.pattern.permute.xlu0 0
      %3070 = vperm.xlu0 %3069, %v2308
      %v3071 = vpop.permute.xlu0 %3070
      %3074 = vset.pattern.permute.xlu0 0
      %3075 = vperm.xlu0 %3074, %v2323
      %v3076 = vpop.permute.xlu0 %3075
      %3079 = vset.pattern.permute.xlu0 0
      %3080 = vperm.xlu0 %3079, %v2338
      %v3081 = vpop.permute.xlu0 %3080
      %3084 = vset.pattern.permute.xlu0 0
      %3085 = vperm.xlu0 %3084, %v2353
      %v3086 = vpop.permute.xlu0 %3085
      %3089 = vset.pattern.permute.xlu0 0
      %3090 = vperm.xlu0 %3089, %v2368
      %v3091 = vpop.permute.xlu0 %3090
      %3094 = vset.pattern.permute.xlu0 0
      %3095 = vperm.xlu0 %3094, %v2383
      %v3096 = vpop.permute.xlu0 %3095
      %3099 = vset.pattern.permute.xlu0 0
      %3100 = vperm.xlu0 %3099, %v2398
      %v3101 = vpop.permute.xlu0 %3100
      %3104 = vset.pattern.permute.xlu0 0
      %3105 = vperm.xlu0 %3104, %v2413
      %v3106 = vpop.permute.xlu0 %3105
      %3109 = vset.pattern.permute.xlu0 0
      %3110 = vperm.xlu0 %3109, %v2428
      %v3111 = vpop.permute.xlu0 %3110
      %v3113 = vmul.f32 %v2546, %v2429
      %v3114 = vmul.f32 %v2551, %v2430
      %v3115 = vmul.f32 %v2556, %v2431
      %v3116 = vmul.f32 %v2561, %v2432
      %v3117 = vmul.f32 %v2566, %v2433
      %v3118 = vmul.f32 %v2571, %v2434
      %v3119 = vmul.f32 %v2576, %v2435
      %v3120 = vmul.f32 %v2581, %v2436
      %v3121 = vmul.f32 %v2586, %v2437
      %v3122 = vmul.f32 %v2591, %v2438
      %v3123 = vmul.f32 %v2596, %v2439
      %v3124 = vmul.f32 %v2601, %v2440
      %v3125 = vmul.f32 %v2606, %v2441
      %v3126 = vmul.f32 %v2611, %v2442
      %v3127 = vmul.f32 %v2616, %v2443
      %v3128 = vmul.f32 %v2621, %v2444
      %v3129 = vmul.f32 %v2626, %v2445
      %v3130 = vmul.f32 %v2631, %v2446
      %v3131 = vmul.f32 %v2636, %v2447
      %v3132 = vmul.f32 %v2641, %v2448
      %v3133 = vmul.f32 %v2646, %v2449
      %v3134 = vmul.f32 %v2651, %v2450
      %v3135 = vmul.f32 %v2656, %v2451
      %v3136 = vmul.f32 %v2661, %v2452
      %v3137 = vmul.f32 %v2666, %v2453
      %v3138 = vmul.f32 %v2671, %v2454
      %v3139 = vmul.f32 %v2676, %v2455
      %v3140 = vmul.f32 %v2681, %v2456
      %v3141 = vmul.f32 %v2686, %v2457
      %v3142 = vmul.f32 %v2691, %v2458
      %v3143 = vmul.f32 %v2696, %v2459
      %v3144 = vmul.f32 %v2701, %v2460
      %v3145 = vmul.f32 %v2706, %v2461
      %v3146 = vmul.f32 %v2711, %v2462
      %v3147 = vmul.f32 %v2716, %v2463
      %v3148 = vmul.f32 %v2721, %v2464
      %v3149 = vmul.f32 %v2726, %v2465
      %v3150 = vmul.f32 %v2731, %v2466
      %v3151 = vmul.f32 %v2736, %v2467
      %v3152 = vmul.f32 %v2741, %v2468
      %v3153 = vmul.f32 %v2746, %v2469
      %v3154 = vmul.f32 %v2751, %v2470
      %v3155 = vmul.f32 %v2756, %v2471
      %v3156 = vmul.f32 %v2761, %v2472
      %v3157 = vmul.f32 %v2766, %v2473
      %v3158 = vmul.f32 %v2771, %v2474
      %v3159 = vmul.f32 %v2776, %v2475
      %v3160 = vmul.f32 %v2781, %v2476
      %v3161 = vmul.f32 %v2786, %v2477
      %v3162 = vmul.f32 %v2791, %v2478
      %v3163 = vmul.f32 %v2796, %v2479
      %v3164 = vmul.f32 %v2801, %v2480
      %v3165 = vmul.f32 %v2806, %v2481
      %v3166 = vmul.f32 %v2811, %v2482
      %v3167 = vmul.f32 %v2816, %v2483
      %v3168 = vmul.f32 %v2821, %v2484
      %v3169 = vmul.f32 %v2826, %v2485
      %v3170 = vmul.f32 %v2831, %v2486
      %v3171 = vmul.f32 %v2836, %v2487
      %v3172 = vmul.f32 %v2841, %v2488
      %v3173 = vmul.f32 %v2846, %v2489
      %v3174 = vmul.f32 %v2851, %v2490
      %v3175 = vmul.f32 %v2856, %v2491
      %v3176 = vmul.f32 %v2861, %v2492
      %v3177 = vmul.f32 %v2866, %v2493
      %v3178 = vmul.f32 %v2871, %v2494
      %v3179 = vmul.f32 %v2876, %v2495
      %v3180 = vmul.f32 %v2881, %v2496
      %v3181 = vmul.f32 %v2886, %v2497
      %v3182 = vmul.f32 %v2891, %v2498
      %v3183 = vmul.f32 %v2896, %v2499
      %v3184 = vmul.f32 %v2901, %v2500
      %v3185 = vmul.f32 %v2906, %v2501
      %v3186 = vmul.f32 %v2911, %v2502
      %v3187 = vmul.f32 %v2916, %v2503
      %v3188 = vmul.f32 %v2921, %v2504
      %v3189 = vmul.f32 %v2926, %v2505
      %v3190 = vmul.f32 %v2931, %v2506
      %v3191 = vmul.f32 %v2936, %v2507
      %v3192 = vmul.f32 %v2941, %v2508
      %v3193 = vmul.f32 %v2946, %v2509
      %v3194 = vmul.f32 %v2951, %v2510
      %v3195 = vmul.f32 %v2956, %v2511
      %v3196 = vmul.f32 %v2961, %v2512
      %v3197 = vmul.f32 %v2966, %v2513
      %v3198 = vmul.f32 %v2971, %v2514
      %v3199 = vmul.f32 %v2976, %v2515
      %v3200 = vmul.f32 %v2981, %v2516
      %v3201 = vmul.f32 %v2986, %v2517
      %v3202 = vmul.f32 %v2991, %v2518
      %v3203 = vmul.f32 %v2996, %v2519
      %v3204 = vmul.f32 %v3001, %v2520
      %v3205 = vmul.f32 %v3006, %v2521
      %v3206 = vmul.f32 %v3011, %v2522
      %v3207 = vmul.f32 %v3016, %v2523
      %v3208 = vmul.f32 %v3021, %v2524
      %v3209 = vmul.f32 %v3026, %v2525
      %v3210 = vmul.f32 %v3031, %v2526
      %v3211 = vmul.f32 %v3036, %v2527
      %v3212 = vmul.f32 %v3041, %v2528
      %v3213 = vmul.f32 %v3046, %v2529
      %v3214 = vmul.f32 %v3051, %v2530
      %v3215 = vmul.f32 %v3056, %v2531
      %v3216 = vmul.f32 %v3061, %v2532
      %v3217 = vmul.f32 %v3066, %v2533
      %v3218 = vmul.f32 %v3071, %v2534
      %v3219 = vmul.f32 %v3076, %v2535
      %v3220 = vmul.f32 %v3081, %v2536
      %v3221 = vmul.f32 %v3086, %v2537
      %v3222 = vmul.f32 %v3091, %v2538
      %v3223 = vmul.f32 %v3096, %v2539
      %v3224 = vmul.f32 %v3101, %v2540
      %v3225 = vmul.f32 %v3106, %v2541
      %v3226 = vmul.f32 %v3111, %v2542
      %vm3227 = vcmask 400384
      %3228 = vst.msk [vmem:[%s145] sm:$0xff] %vm3227, %v3113
      %3229 = vst.msk [vmem:[%s145 + $0x8] sm:$0xff] %vm3227, %v3114
      %3230 = vst.msk [vmem:[%s145 + $0x10] sm:$0xff] %vm3227, %v3115
      %3231 = vst.msk [vmem:[%s145 + $0x18] sm:$0xff] %vm3227, %v3116
      %3232 = vst.msk [vmem:[%s145 + $0x20] sm:$0xff] %vm3227, %v3117
      %3233 = vst.msk [vmem:[%s145 + $0x28] sm:$0xff] %vm3227, %v3118
      %3234 = vst.msk [vmem:[%s145 + $0x30] sm:$0xff] %vm3227, %v3119
      %3235 = vst.msk [vmem:[%s145 + $0x38] sm:$0xff] %vm3227, %v3120
      %3236 = vst.msk [vmem:[%s145 + $0x40] sm:$0xff] %vm3227, %v3121
      %3237 = vst.msk [vmem:[%s145 + $0x48] sm:$0xff] %vm3227, %v3122
      %3238 = vst.msk [vmem:[%s145 + $0x50] sm:$0xff] %vm3227, %v3123
      %3239 = vst.msk [vmem:[%s145 + $0x58] sm:$0xff] %vm3227, %v3124
      %3240 = vst.msk [vmem:[%s145 + $0x60] sm:$0xff] %vm3227, %v3125
      %3241 = vst.msk [vmem:[%s145 + $0x68] sm:$0xff] %vm3227, %v3126
      %3242 = vst.msk [vmem:[%s145 + $0x70] sm:$0xff] %vm3227, %v3127
      %3243 = vst.msk [vmem:[%s145 + $0x78] sm:$0xff] %vm3227, %v3128
      %3244 = vst.msk [vmem:[%s145 + $0x80] sm:$0xff] %vm3227, %v3129
      %3245 = vst.msk [vmem:[%s145 + $0x88] sm:$0xff] %vm3227, %v3130
      %3246 = vst.msk [vmem:[%s145 + $0x90] sm:$0xff] %vm3227, %v3131
      %3247 = vst.msk [vmem:[%s145 + $0x98] sm:$0xff] %vm3227, %v3132
      %3248 = vst.msk [vmem:[%s145 + $0xa0] sm:$0xff] %vm3227, %v3133
      %3249 = vst.msk [vmem:[%s145 + $0xa8] sm:$0xff] %vm3227, %v3134
      %3250 = vst.msk [vmem:[%s145 + $0xb0] sm:$0xff] %vm3227, %v3135
      %3251 = vst.msk [vmem:[%s145 + $0xb8] sm:$0xff] %vm3227, %v3136
      %3252 = vst.msk [vmem:[%s145 + $0xc0] sm:$0xff] %vm3227, %v3137
      %3253 = vst.msk [vmem:[%s145 + $0xc8] sm:$0xff] %vm3227, %v3138
      %3254 = vst.msk [vmem:[%s145 + $0xd0] sm:$0xff] %vm3227, %v3139
      %3255 = vst.msk [vmem:[%s145 + $0xd8] sm:$0xff] %vm3227, %v3140
      %3256 = vst.msk [vmem:[%s145 + $0xe0] sm:$0xff] %vm3227, %v3141
      %3257 = vst.msk [vmem:[%s145 + $0xe8] sm:$0xff] %vm3227, %v3142
      %3258 = vst.msk [vmem:[%s145 + $0xf0] sm:$0xff] %vm3227, %v3143
      %3259 = vst.msk [vmem:[%s145 + $0xf8] sm:$0xff] %vm3227, %v3144
      %3260 = vst.msk [vmem:[%s145 + $0x100] sm:$0xff] %vm3227, %v3145
      %3261 = vst.msk [vmem:[%s145 + $0x108] sm:$0xff] %vm3227, %v3146
      %3262 = vst.msk [vmem:[%s145 + $0x110] sm:$0xff] %vm3227, %v3147
      %3263 = vst.msk [vmem:[%s145 + $0x118] sm:$0xff] %vm3227, %v3148
      %3264 = vst.msk [vmem:[%s145 + $0x120] sm:$0xff] %vm3227, %v3149
      %3265 = vst.msk [vmem:[%s145 + $0x128] sm:$0xff] %vm3227, %v3150
      %3266 = vst.msk [vmem:[%s145 + $0x130] sm:$0xff] %vm3227, %v3151
      %3267 = vst.msk [vmem:[%s145 + $0x138] sm:$0xff] %vm3227, %v3152
      %3268 = vst.msk [vmem:[%s145 + $0x140] sm:$0xff] %vm3227, %v3153
      %3269 = vst.msk [vmem:[%s145 + $0x148] sm:$0xff] %vm3227, %v3154
      %3270 = vst.msk [vmem:[%s145 + $0x150] sm:$0xff] %vm3227, %v3155
      %3271 = vst.msk [vmem:[%s145 + $0x158] sm:$0xff] %vm3227, %v3156
      %3272 = vst.msk [vmem:[%s145 + $0x160] sm:$0xff] %vm3227, %v3157
      %3273 = vst.msk [vmem:[%s145 + $0x168] sm:$0xff] %vm3227, %v3158
      %3274 = vst.msk [vmem:[%s145 + $0x170] sm:$0xff] %vm3227, %v3159
      %3275 = vst.msk [vmem:[%s145 + $0x178] sm:$0xff] %vm3227, %v3160
      %3276 = vst.msk [vmem:[%s145 + $0x180] sm:$0xff] %vm3227, %v3161
      %3277 = vst.msk [vmem:[%s145 + $0x188] sm:$0xff] %vm3227, %v3162
      %3278 = vst.msk [vmem:[%s145 + $0x190] sm:$0xff] %vm3227, %v3163
      %3279 = vst.msk [vmem:[%s145 + $0x198] sm:$0xff] %vm3227, %v3164
      %3280 = vst.msk [vmem:[%s145 + $0x1a0] sm:$0xff] %vm3227, %v3165
      %3281 = vst.msk [vmem:[%s145 + $0x1a8] sm:$0xff] %vm3227, %v3166
      %3282 = vst.msk [vmem:[%s145 + $0x1b0] sm:$0xff] %vm3227, %v3167
      %3283 = vst.msk [vmem:[%s145 + $0x1b8] sm:$0xff] %vm3227, %v3168
      %3284 = vst.msk [vmem:[%s145 + $0x1c0] sm:$0xff] %vm3227, %v3169
      %3285 = vst.msk [vmem:[%s145 + $0x1c8] sm:$0xff] %vm3227, %v3170
      %3286 = vst.msk [vmem:[%s145 + $0x1d0] sm:$0xff] %vm3227, %v3171
      %3287 = vst.msk [vmem:[%s145 + $0x1d8] sm:$0xff] %vm3227, %v3172
      %3288 = vst.msk [vmem:[%s145 + $0x1e0] sm:$0xff] %vm3227, %v3173
      %3289 = vst.msk [vmem:[%s145 + $0x1e8] sm:$0xff] %vm3227, %v3174
      %3290 = vst.msk [vmem:[%s145 + $0x1f0] sm:$0xff] %vm3227, %v3175
      %3291 = vst.msk [vmem:[%s145 + $0x1f8] sm:$0xff] %vm3227, %v3176
      %3292 = vst.msk [vmem:[%s145 + $0x200] sm:$0xff] %vm3227, %v3177
      %3293 = vst.msk [vmem:[%s145 + $0x208] sm:$0xff] %vm3227, %v3178
      %3294 = vst.msk [vmem:[%s145 + $0x210] sm:$0xff] %vm3227, %v3179
      %3295 = vst.msk [vmem:[%s145 + $0x218] sm:$0xff] %vm3227, %v3180
      %3296 = vst.msk [vmem:[%s145 + $0x220] sm:$0xff] %vm3227, %v3181
      %3297 = vst.msk [vmem:[%s145 + $0x228] sm:$0xff] %vm3227, %v3182
      %3298 = vst.msk [vmem:[%s145 + $0x230] sm:$0xff] %vm3227, %v3183
      %3299 = vst.msk [vmem:[%s145 + $0x238] sm:$0xff] %vm3227, %v3184
      %3300 = vst.msk [vmem:[%s145 + $0x240] sm:$0xff] %vm3227, %v3185
      %3301 = vst.msk [vmem:[%s145 + $0x248] sm:$0xff] %vm3227, %v3186
      %3302 = vst.msk [vmem:[%s145 + $0x250] sm:$0xff] %vm3227, %v3187
      %3303 = vst.msk [vmem:[%s145 + $0x258] sm:$0xff] %vm3227, %v3188
      %3304 = vst.msk [vmem:[%s145 + $0x260] sm:$0xff] %vm3227, %v3189
      %3305 = vst.msk [vmem:[%s145 + $0x268] sm:$0xff] %vm3227, %v3190
      %3306 = vst.msk [vmem:[%s145 + $0x270] sm:$0xff] %vm3227, %v3191
      %3307 = vst.msk [vmem:[%s145 + $0x278] sm:$0xff] %vm3227, %v3192
      %3308 = vst.msk [vmem:[%s145 + $0x280] sm:$0xff] %vm3227, %v3193
      %3309 = vst.msk [vmem:[%s145 + $0x288] sm:$0xff] %vm3227, %v3194
      %3310 = vst.msk [vmem:[%s145 + $0x290] sm:$0xff] %vm3227, %v3195
      %3311 = vst.msk [vmem:[%s145 + $0x298] sm:$0xff] %vm3227, %v3196
      %3312 = vst.msk [vmem:[%s145 + $0x2a0] sm:$0xff] %vm3227, %v3197
      %3313 = vst.msk [vmem:[%s145 + $0x2a8] sm:$0xff] %vm3227, %v3198
      %3314 = vst.msk [vmem:[%s145 + $0x2b0] sm:$0xff] %vm3227, %v3199
      %3315 = vst.msk [vmem:[%s145 + $0x2b8] sm:$0xff] %vm3227, %v3200
      %3316 = vst.msk [vmem:[%s145 + $0x2c0] sm:$0xff] %vm3227, %v3201
      %3317 = vst.msk [vmem:[%s145 + $0x2c8] sm:$0xff] %vm3227, %v3202
      %3318 = vst.msk [vmem:[%s145 + $0x2d0] sm:$0xff] %vm3227, %v3203
      %3319 = vst.msk [vmem:[%s145 + $0x2d8] sm:$0xff] %vm3227, %v3204
      %3320 = vst.msk [vmem:[%s145 + $0x2e0] sm:$0xff] %vm3227, %v3205
      %3321 = vst.msk [vmem:[%s145 + $0x2e8] sm:$0xff] %vm3227, %v3206
      %3322 = vst.msk [vmem:[%s145 + $0x2f0] sm:$0xff] %vm3227, %v3207
      %3323 = vst.msk [vmem:[%s145 + $0x2f8] sm:$0xff] %vm3227, %v3208
      %3324 = vst.msk [vmem:[%s145 + $0x300] sm:$0xff] %vm3227, %v3209
      %3325 = vst.msk [vmem:[%s145 + $0x308] sm:$0xff] %vm3227, %v3210
      %3326 = vst.msk [vmem:[%s145 + $0x310] sm:$0xff] %vm3227, %v3211
      %3327 = vst.msk [vmem:[%s145 + $0x318] sm:$0xff] %vm3227, %v3212
      %3328 = vst.msk [vmem:[%s145 + $0x320] sm:$0xff] %vm3227, %v3213
      %3329 = vst.msk [vmem:[%s145 + $0x328] sm:$0xff] %vm3227, %v3214
      %3330 = vst.msk [vmem:[%s145 + $0x330] sm:$0xff] %vm3227, %v3215
      %3331 = vst.msk [vmem:[%s145 + $0x338] sm:$0xff] %vm3227, %v3216
      %3332 = vst.msk [vmem:[%s145 + $0x340] sm:$0xff] %vm3227, %v3217
      %3333 = vst.msk [vmem:[%s145 + $0x348] sm:$0xff] %vm3227, %v3218
      %3334 = vst.msk [vmem:[%s145 + $0x350] sm:$0xff] %vm3227, %v3219
      %3335 = vst.msk [vmem:[%s145 + $0x358] sm:$0xff] %vm3227, %v3220
      %3336 = vst.msk [vmem:[%s145 + $0x360] sm:$0xff] %vm3227, %v3221
      %3337 = vst.msk [vmem:[%s145 + $0x368] sm:$0xff] %vm3227, %v3222
      %3338 = vst.msk [vmem:[%s145 + $0x370] sm:$0xff] %vm3227, %v3223
      %3339 = vst.msk [vmem:[%s145 + $0x378] sm:$0xff] %vm3227, %v3224
      %3340 = vst.msk [vmem:[%s145 + $0x380] sm:$0xff] %vm3227, %v3225
      %3341 = vst.msk [vmem:[%s145 + $0x388] sm:$0xff] %vm3227, %v3226
      %s3342 = smul.u32 114, %s13
      %p3343 = scmp.lt.s32.totalorder %s3342, 227
      %s3344 = scalar_select %p3343, %s3342, 227
      %s3345 = smul.addr %s3344, 8
      %s3346 = scalar_lea.vmem %s2, %s3345
      // Predicated region
      $region29: #{tpu_custom_call.1} parent=27 // pred_check
        %p3347 = pneg %p78
      $region30: #{tpu_custom_call.1} parent=27 // pred_check_branch
        %3349 = sbr.rel (%p3347) target = $region32
      $region31: #{tpu_custom_call.1} parent=27 // pred_region
        %s3350 = smul.u32 114, %s13
      $region32: #{tpu_custom_call.1} parent=27 // pred_fallthru
        _
    $region28: #{tpu_custom_call.1} parent=5 // pred_fallthru
      _
    %p3351 = scmp.le.s32.totalorder 2, %s8
    // Predicated region
    $region33: #{tpu_custom_call.1} parent=5 // pred_check
      %p3352 = pneg %p3351
    $region34: #{tpu_custom_call.1} parent=5 // pred_check_branch
      %3354 = sbr.rel (%p3352) target = $region36
    $region35: #{tpu_custom_call.1} parent=5 // pred_region
      %s3355 = ssub.s32 %s8, 2
      // Predicated region
      $region37: #{tpu_custom_call.1} parent=35 // pred_check
        %p3356 = pneg %p84
      $region38: #{tpu_custom_call.1} parent=35 // pred_check_branch
        %3358 = sbr.rel (%p3356) target = $region40
      $region39: #{tpu_custom_call.1} parent=35 // pred_region
        %s3359 = smul.u32 114, %s14
        %p3360 = scmp.lt.s32.totalorder %s3359, 227
        %s3361 = scalar_select %p3360, %s3359, 227
        %s3362 = smul.addr %s3361, 8
        %s3363 = scalar_lea.vmem %s2, %s3362
      $region40: #{tpu_custom_call.1} parent=35 // pred_fallthru
        _
    $region36: #{tpu_custom_call.1} parent=5 // pred_fallthru
      _
  $region6: #{tpu_custom_call.1} parent=0 // loop_footer
    %s12 = sadd.s32 1, %s8
  $region7: #{tpu_custom_call.1} parent=0 // loop_footer_branch
    %7 = sbr.rel target = $region3
  $region8: #{tpu_custom_call.1} parent=0 // loop_exit
    _

</llo_original>
